<compile_context>
chip_gen: v6e
topology: v6e:2x2x1
jax: 0.10.0
libtpu: 0.0.40
codegen_flags: <defaults>
</compile_context>

<pallas_src>
import functools

import jax
import jax.numpy as jnp
from jax.experimental import pallas as pl
from jax.experimental.pallas import tpu as pltpu


_MAX_ROW_TILE = 2048      # beyond ~1024 rows the HBM roofline is already ~85-86% saturated
_MIN_ROW_TILE = 8         # sublane alignment


def _round_up(x, m):
    return -(-x // m) * m


def _cdiv(a, b):
    return -(-a // b)


# --------------------------------------------------------------------------- #
# Generation / capability detection (all best-effort, all cached)
# --------------------------------------------------------------------------- #

def _device_kind() -> str:
    try:
        return jax.devices()[0].device_kind.lower()
    except Exception:
        return ""


@functools.lru_cache(maxsize=None)
def _tpu_vmem_budget_bytes() -> int:
    """Per-TensorCore VMEM budget (with headroom) for resident weights + tiles."""
    # Prefer the hardware query; fall back to device_kind heuristics.
    try:
        phys = int(pltpu.get_tpu_info().vmem_capacity_bytes)
        if phys > 0:
            return int(phys * 3 // 4)
    except Exception:
        pass
    kind = _device_kind()
    if "v5" in kind or "v6" in kind:
        return 96 << 20            # 128 MiB physical on v5e/v5p/v6e
    return 48 << 20                # conservative: v7x has only 64 MiB per TC


@functools.lru_cache(maxsize=None)
def _erf_supported() -> bool:
    """Trace-time probe: can this Mosaic build lower exact-erf GELU?"""
    def k(x_ref, o_ref):
        o_ref[...] = jax.nn.gelu(x_ref[...], approximate=False)

    try:
        fn = pl.pallas_call(k, out_shape=jax.ShapeDtypeStruct((8, 128), jnp.float32))
        jax.jit(fn).lower(jax.ShapeDtypeStruct((8, 128), jnp.float32)).compile()
        return True
    except Exception:
        return False


@functools.lru_cache(maxsize=None)
def _single_buffered_weights_supported() -> bool:
    """Trace-time probe: pipeline_mode=pl.Buffered(1) on grid-invariant operands."""
    def k(w_ref, x_ref, o_ref):
        o_ref[...] = x_ref[...] + w_ref[...]

    try:
        fn = pl.pallas_call(
            k,
            out_shape=jax.ShapeDtypeStruct((16, 128), jnp.float32),
            grid=(2,),
            in_specs=[
                pl.BlockSpec((8, 128), lambda i: (0, 0), pipeline_mode=pl.Buffered(1)),
                pl.BlockSpec((8, 128), lambda i: (i, 0)),
            ],
            out_specs=pl.BlockSpec((8, 128), lambda i: (i, 0)),
        )
        jax.jit(fn).lower(
            jax.ShapeDtypeStruct((8, 128), jnp.float32),
            jax.ShapeDtypeStruct((16, 128), jnp.float32),
        ).compile()
        return True
    except Exception:
        return False


def _default_approximate_gelu() -> bool:
    # tanh-GELU on v5e: routes the transcendental to the otherwise idle EUP slot
    # instead of an erf polynomial competing with the f32 epilogue for the VALU
    # slots. Also fall back to tanh if this build cannot lower lax.erf at all.
    kind = _device_kind()
    if ("v5 lite" in kind) or ("v5e" in kind) or ("v5litepod" in kind):
        return True
    return not _erf_supported()


# --------------------------------------------------------------------------- #
# VMEM accounting / tiling
# --------------------------------------------------------------------------- #

def _vmem_footprint(block_rows, E, P, in_itemsize, out_itemsize, weight_buffers):
    """(total_bytes, per_row_bytes, fixed_bytes). Counts double-buffered x/out
    tiles, the f32 intermediates the kernel materializes (projected / gelu / h /
    centered ~= 4 tiles of width P), resident weights and the f32 vectors."""
    per_row = (2 * E * in_itemsize        # double-buffered x tile
               + 2 * P * out_itemsize     # double-buffered out tile
               + 4 * P * 4)               # f32 intermediates
    fixed = weight_buffers * ((E * P + P * P) * in_itemsize + 4 * P * 4)
    return per_row * block_rows + fixed, per_row, fixed


def _choose_block_rows(B, E, P, in_itemsize, out_itemsize, budget, weight_buffers):
    _, per_row, fixed = _vmem_footprint(_MIN_ROW_TILE, E, P,
                                        in_itemsize, out_itemsize, weight_buffers)
    avail = budget - fixed
    max_rows = avail // per_row if avail > per_row * _MIN_ROW_TILE else _MIN_ROW_TILE
    max_rows = max(_MIN_ROW_TILE, (max_rows // _MIN_ROW_TILE) * _MIN_ROW_TILE)
    max_rows = min(max_rows, _MAX_ROW_TILE)

    block_rows = min(max_rows, _round_up(B, _MIN_ROW_TILE))
    if B > _MIN_ROW_TILE:
        # >= 2 grid steps (DMA/compute pipelining) with an even step count so
        # both of v7x's TensorCores get work on the "parallel" row axis.
        steps = max(2, _cdiv(B, block_rows))
        if steps % 2:
            steps += 1
        block_rows = min(block_rows,
                         max(_MIN_ROW_TILE, _round_up(_cdiv(B, steps), _MIN_ROW_TILE)))
    return block_rows


# --------------------------------------------------------------------------- #
# Kernel
# --------------------------------------------------------------------------- #

def _projection_kernel(x_ref, w1_ref, b1_ref, w2_ref, b2_ref,
                       gamma_ref, beta_ref, o_ref, *, eps, approximate_gelu):
    # Matmul operands in their native dtype (bf16 x bf16 -> f32 on the MXU);
    # accumulation and the whole epilogue are f32.
    x = x_ref[...]

    projected = jnp.dot(x, w1_ref[...], preferred_element_type=jnp.float32)
    projected = projected + b1_ref[...]

    g = jax.nn.gelu(projected, approximate=approximate_gelu)

    h = jnp.dot(g.astype(w2_ref.dtype), w2_ref[...],
                preferred_element_type=jnp.float32) + b2_ref[...]

    # dropout(p=0.1) is identity in eval mode.
    # TODO(synk): training-mode dropout (pltpu.prng_random_bits mask) not emitted.
    h = h + projected

    # LayerNorm over the last (lane) dim: two independent XLU reductions, then
    # var = E[h^2] - mean^2 (one fewer full-tile VALU pass than center-then-square).
    inv_p = 1.0 / h.shape[-1]
    mean = jnp.sum(h, axis=-1, keepdims=True) * inv_p
    mean_sq = jnp.sum(h * h, axis=-1, keepdims=True) * inv_p
    var = jnp.maximum(mean_sq - mean * mean, 0.0)
    out = (h - mean) * jax.lax.rsqrt(var + eps) * gamma_ref[...] + beta_ref[...]
    o_ref[...] = out.astype(o_ref.dtype)


def projection_layer(x, w1, b1, w2, b2, gamma, beta, *, eps=1e-5,
                     block_rows=None, approximate_gelu=None, mxu_dtype=None):
    """x: [B, E]; w1: [E, P]; b1: [P]; w2: [P, P]; b2: [P]; gamma/beta: [P].

    Weights are pre-transposed so the kernel does plain row-major MXU matmuls.
    E and P should be multiples of 128 for lane-dense loads/stores (perf only).
    `mxu_dtype=jnp.bfloat16` can be passed to run f32 inputs at native MXU rate
    on v7x (f32 accumulation / epilogue kept).
    """
    B, E = x.shape
    Ew, P = w1.shape
    assert Ew == E and w2.shape == (P, P)

    if approximate_gelu is None:
        approximate_gelu = _default_approximate_gelu()

    out_dtype = x.dtype
    cdtype = jnp.dtype(mxu_dtype) if mxu_dtype is not None else jnp.dtype(x.dtype)
    x_mm = x.astype(cdtype)
    w1 = w1.astype(cdtype)
    w2 = w2.astype(cdtype)
    # Bias / LayerNorm params stay f32 (cheap, keeps the f32 epilogue exact).
    b1_2d = b1.reshape(1, P).astype(jnp.float32)
    b2_2d = b2.reshape(1, P).astype(jnp.float32)
    gamma_2d = gamma.reshape(1, P).astype(jnp.float32)
    beta_2d = beta.reshape(1, P).astype(jnp.float32)

    in_itemsize = cdtype.itemsize
    out_itemsize = jnp.dtype(out_dtype).itemsize

    single_buf = _single_buffered_weights_supported()
    weight_buffers = 1 if single_buf else 2
    budget = _tpu_vmem_budget_bytes()

    if block_rows is None:
        block_rows = _choose_block_rows(B, E, P, in_itemsize, out_itemsize,
                                        budget, weight_buffers)
    else:
        block_rows = max(_MIN_ROW_TILE,
                         (int(block_rows) // _MIN_ROW_TILE) * _MIN_ROW_TILE)
        block_rows = min(block_rows, _round_up(B, _MIN_ROW_TILE))

    # cdiv grid over a padded batch: tile size is decoupled from B's divisors.
    B_pad = _round_up(B, block_rows)
    if B_pad != B:
        x_mm = jnp.pad(x_mm, ((0, B_pad - B), (0, 0)))
    grid = (B_pad // block_rows,)

    # TODO(synk): for very wide towers where W1/W2 no longer fit VMEM, add a
    # K-tiling grid axis marked "arbitrary" with an f32 VMEM accumulator instead
    # of loading the full (E, P)/(P, P) weight blocks.

    vmem_needed, _, _ = _vmem_footprint(block_rows, E, P, in_itemsize,
                                        out_itemsize, weight_buffers)
    vmem_limit = int(min(max(budget, vmem_needed * 5 // 4), 128 << 20))

    kernel = functools.partial(_projection_kernel, eps=eps,
                               approximate_gelu=approximate_gelu)

    # Grid-invariant operands (constant index_map): single VMEM buffer when the
    # build supports it; default double-buffering otherwise.
    w_kwargs = dict(pipeline_mode=pl.Buffered(1)) if single_buf else {}
    const = lambda i: (0, 0)

    # TODO(synk): verify the "parallel" axis shards across v7x's two TensorCores
    # on this jax build; switch to pltpu.CORE_PARALLEL / explicit core axis if not.
    out = pl.pallas_call(
        kernel,
        out_shape=jax.ShapeDtypeStruct((B_pad, P), out_dtype),
        grid_spec=pltpu.PrefetchScalarGridSpec(
            num_scalar_prefetch=0,
            grid=grid,
            in_specs=[
                pl.BlockSpec((block_rows, E), lambda i: (i, 0)),   # x tile
                pl.BlockSpec((E, P), const, **w_kwargs),           # W1 (resident)
                pl.BlockSpec((1, P), const, **w_kwargs),           # b1
                pl.BlockSpec((P, P), const, **w_kwargs),           # W2 (resident)
                pl.BlockSpec((1, P), const, **w_kwargs),           # b2
                pl.BlockSpec((1, P), const, **w_kwargs),           # gamma
                pl.BlockSpec((1, P), const, **w_kwargs),           # beta
            ],
            out_specs=pl.BlockSpec((block_rows, P), lambda i: (i, 0)),
        ),
        compiler_params=pltpu.CompilerParams(
            dimension_semantics=("parallel",),
            vmem_limit_bytes=vmem_limit,
        ),
    )(x_mm, w1, b1_2d, w2, b2_2d, gamma_2d, beta_2d)

    return out[:B] if B_pad != B else out


def _reference(x, w1, b1, w2, b2, gamma, beta, eps=1e-5, approximate_gelu=False):
    projected = x @ w1 + b1
    h = jax.nn.gelu(projected, approximate=approximate_gelu) @ w2 + b2 + projected
    mean = jnp.mean(h, axis=-1, keepdims=True)
    var = jnp.mean((h - mean) ** 2, axis=-1, keepdims=True)
    return (h - mean) / jnp.sqrt(var + eps) * gamma + beta


if __name__ == "__main__":
    # Small but TPU-friendly projection-head shapes: lane dims (E, P) are
    # multiples of 128 and the batch gives a >=2-step row grid.
    B, E, P = 512, 256, 256

    key = jax.random.PRNGKey(0)
    kx, k1, k2, k3, k4 = jax.random.split(key, 5)

    x32 = jax.random.normal(kx, (B, E), dtype=jnp.float32)

    bound1 = 1.0 / (E ** 0.5)
    w1 = jax.random.uniform(k1, (E, P), jnp.float32, -bound1, bound1)   # projection (pre-transposed)
    b1 = jax.random.uniform(k2, (P,), jnp.float32, -bound1, bound1)
    bound2 = 1.0 / (P ** 0.5)
    w2 = jax.random.uniform(k3, (P, P), jnp.float32, -bound2, bound2)   # fc (pre-transposed)
    b2 = jax.random.uniform(k4, (P,), jnp.float32, -bound2, bound2)
    gamma = jnp.ones((P,), jnp.float32)                                  # layer_norm.weight
    beta = jnp.zeros((P,), jnp.float32)                                  # layer_norm.bias

    # Resolve the GELU flavor once (tanh on v5e / builds without erf), and use
    # the same flavor in the reference so the check stays tight.
    approx = _default_approximate_gelu()

    # f32 path.
    out32 = jax.block_until_ready(
        projection_layer(x32, w1, b1, w2, b2, gamma, beta, approximate_gelu=approx))
    ref32 = _reference(x32, w1, b1, w2, b2, gamma, beta, approximate_gelu=approx)
    assert out32.shape == (B, P)
    assert jnp.allclose(out32, ref32, atol=1e-2, rtol=1e-2), "f32 mismatch vs reference"

    # bf16 path: operands feed the MXU at native bf16 rate with f32 accumulation.
    xb = x32.astype(jnp.bfloat16)
    w1b = w1.astype(jnp.bfloat16)
    w2b = w2.astype(jnp.bfloat16)
    outb = jax.block_until_ready(
        projection_layer(xb, w1b, b1, w2b, b2, gamma, beta, approximate_gelu=approx))
    refb = _reference(xb.astype(jnp.float32), w1b.astype(jnp.float32), b1,
                      w2b.astype(jnp.float32), b2, gamma, beta,
                      approximate_gelu=approx)
    assert outb.dtype == jnp.bfloat16
    assert jnp.allclose(outb.astype(jnp.float32), refb, atol=5e-2, rtol=5e-2), \
        "bf16 mismatch vs reference"

    # Ragged batch (exercises the cdiv grid + padded tail path).
    Br = 200
    out_r = jax.block_until_ready(
        projection_layer(x32[:Br], w1, b1, w2, b2, gamma, beta, approximate_gelu=approx))
    assert out_r.shape == (Br, P)
    assert jnp.allclose(out_r, ref32[:Br], atol=1e-2, rtol=1e-2), \
        "ragged-batch mismatch vs reference"

    print("KERNEL_OK")
</pallas_src>

<mosaic_0001>
module attributes {stable_mosaic.version = 11 : i64} {
  func.func @_projection_kernel(%arg0: i32, %arg1: memref<256x256xf32, #tpu.memory_space<vmem>>, %arg2: memref<256x256xf32, #tpu.memory_space<vmem>>, %arg3: memref<1x256xf32, #tpu.memory_space<vmem>>, %arg4: memref<256x256xf32, #tpu.memory_space<vmem>>, %arg5: memref<1x256xf32, #tpu.memory_space<vmem>>, %arg6: memref<1x256xf32, #tpu.memory_space<vmem>>, %arg7: memref<1x256xf32, #tpu.memory_space<vmem>>, %arg8: memref<256x256xf32, #tpu.memory_space<vmem>>) attributes {dimension_semantics = [#tpu.dimension_semantics<parallel>], iteration_bounds = array<i64: 2>, scalar_prefetch = 0 : i64, scratch_operands = 0 : i64, tpu.core_type = #tpu.core_type<tc>, window_params = [{transform_indices = @transform_0, window_bounds = array<i64: 256, 256>}, {pipeline_mode = #tpu.pipeline_mode<synchronous>, transform_indices = @transform_1, window_bounds = array<i64: 256, 256>}, {pipeline_mode = #tpu.pipeline_mode<synchronous>, transform_indices = @transform_2, window_bounds = array<i64: 1, 256>}, {pipeline_mode = #tpu.pipeline_mode<synchronous>, transform_indices = @transform_3, window_bounds = array<i64: 256, 256>}, {pipeline_mode = #tpu.pipeline_mode<synchronous>, transform_indices = @transform_4, window_bounds = array<i64: 1, 256>}, {pipeline_mode = #tpu.pipeline_mode<synchronous>, transform_indices = @transform_5, window_bounds = array<i64: 1, 256>}, {pipeline_mode = #tpu.pipeline_mode<synchronous>, transform_indices = @transform_6, window_bounds = array<i64: 1, 256>}, {transform_indices = @transform_7, window_bounds = array<i64: 256, 256>}]} {
    %c0 = arith.constant 0 : index
    %c0_0 = arith.constant 0 : index
    %0 = vector.load %arg1[%c0, %c0_0] : memref<256x256xf32, #tpu.memory_space<vmem>>, vector<256x256xf32>
    %c0_1 = arith.constant 0 : index
    %c0_2 = arith.constant 0 : index
    %1 = vector.load %arg2[%c0_1, %c0_2] : memref<256x256xf32, #tpu.memory_space<vmem>>, vector<256x256xf32>
    %cst = arith.constant dense<0.000000e+00> : vector<256x256xf32>
    %2 = tpu.matmul %0, %1, %cst {dimension_numbers = #tpu.dot_dimension_numbers<[1], [0], [0], [1], [0, 0, 1, 1], [], []>} : vector<256x256xf32>, vector<256x256xf32>, vector<256x256xf32> -> vector<256x256xf32>
    %c0_3 = arith.constant 0 : index
    %c0_4 = arith.constant 0 : index
    %3 = vector.load %arg3[%c0_3, %c0_4] : memref<1x256xf32, #tpu.memory_space<vmem>>, vector<1x256xf32>
    %4 = vector.broadcast %3 : vector<1x256xf32> to vector<256x256xf32>
    %5 = arith.addf %2, %4 : vector<256x256xf32>
    %6 = arith.mulf %5, %5 : vector<256x256xf32>
    %7 = arith.mulf %5, %6 : vector<256x256xf32>
    %cst_5 = arith.constant 4.471500e-02 : f32
    %8 = vector.broadcast %cst_5 : f32 to vector<256x256xf32>
    %9 = arith.mulf %8, %7 : vector<256x256xf32>
    %10 = arith.addf %5, %9 : vector<256x256xf32>
    %cst_6 = arith.constant 0.797884583 : f32
    %11 = vector.broadcast %cst_6 : f32 to vector<256x256xf32>
    %12 = arith.mulf %11, %10 : vector<256x256xf32>
    %13 = math.tanh %12 : vector<256x256xf32>
    %cst_7 = arith.constant 1.000000e+00 : f32
    %14 = vector.broadcast %cst_7 : f32 to vector<256x256xf32>
    %15 = arith.addf %14, %13 : vector<256x256xf32>
    %cst_8 = arith.constant 5.000000e-01 : f32
    %16 = vector.broadcast %cst_8 : f32 to vector<256x256xf32>
    %17 = arith.mulf %16, %15 : vector<256x256xf32>
    %18 = arith.mulf %5, %17 : vector<256x256xf32>
    %c0_9 = arith.constant 0 : index
    %c0_10 = arith.constant 0 : index
    %19 = vector.load %arg4[%c0_9, %c0_10] : memref<256x256xf32, #tpu.memory_space<vmem>>, vector<256x256xf32>
    %cst_11 = arith.constant dense<0.000000e+00> : vector<256x256xf32>
    %20 = tpu.matmul %18, %19, %cst_11 {dimension_numbers = #tpu.dot_dimension_numbers<[1], [0], [0], [1], [0, 0, 1, 1], [], []>} : vector<256x256xf32>, vector<256x256xf32>, vector<256x256xf32> -> vector<256x256xf32>
    %c0_12 = arith.constant 0 : index
    %c0_13 = arith.constant 0 : index
    %21 = vector.load %arg5[%c0_12, %c0_13] : memref<1x256xf32, #tpu.memory_space<vmem>>, vector<1x256xf32>
    %22 = vector.broadcast %21 : vector<1x256xf32> to vector<256x256xf32>
    %23 = arith.addf %20, %22 : vector<256x256xf32>
    %24 = arith.addf %23, %5 : vector<256x256xf32>
    %cst_14 = arith.constant dense<0.000000e+00> : vector<256xf32>
    %25 = vector.multi_reduction <add>, %24, %cst_14 [1] : vector<256x256xf32> to vector<256xf32>
    %26 = vector.shape_cast %25 : vector<256xf32> to vector<256x1xf32>
    %cst_15 = arith.constant 3.906250e-03 : f32
    %27 = vector.broadcast %cst_15 : f32 to vector<256x1xf32>
    %28 = arith.mulf %26, %27 : vector<256x1xf32>
    %29 = arith.mulf %24, %24 : vector<256x256xf32>
    %cst_16 = arith.constant dense<0.000000e+00> : vector<256xf32>
    %30 = vector.multi_reduction <add>, %29, %cst_16 [1] : vector<256x256xf32> to vector<256xf32>
    %31 = vector.shape_cast %30 : vector<256xf32> to vector<256x1xf32>
    %cst_17 = arith.constant 3.906250e-03 : f32
    %32 = vector.broadcast %cst_17 : f32 to vector<256x1xf32>
    %33 = arith.mulf %31, %32 : vector<256x1xf32>
    %34 = arith.mulf %28, %28 : vector<256x1xf32>
    %35 = arith.subf %33, %34 : vector<256x1xf32>
    %cst_18 = arith.constant 0.000000e+00 : f32
    %36 = vector.broadcast %cst_18 : f32 to vector<256x1xf32>
    %37 = arith.maximumf %35, %36 : vector<256x1xf32>
    %38 = vector.broadcast %28 : vector<256x1xf32> to vector<256x256xf32>
    %39 = arith.subf %24, %38 : vector<256x256xf32>
    %cst_19 = arith.constant 9.99999974E-6 : f32
    %40 = vector.broadcast %cst_19 : f32 to vector<256x1xf32>
    %41 = arith.addf %37, %40 : vector<256x1xf32>
    %42 = math.rsqrt %41 : vector<256x1xf32>
    %43 = vector.broadcast %42 : vector<256x1xf32> to vector<256x256xf32>
    %44 = arith.mulf %39, %43 : vector<256x256xf32>
    %c0_20 = arith.constant 0 : index
    %c0_21 = arith.constant 0 : index
    %45 = vector.load %arg6[%c0_20, %c0_21] : memref<1x256xf32, #tpu.memory_space<vmem>>, vector<1x256xf32>
    %46 = vector.broadcast %45 : vector<1x256xf32> to vector<256x256xf32>
    %47 = arith.mulf %44, %46 : vector<256x256xf32>
    %c0_22 = arith.constant 0 : index
    %c0_23 = arith.constant 0 : index
    %48 = vector.load %arg7[%c0_22, %c0_23] : memref<1x256xf32, #tpu.memory_space<vmem>>, vector<1x256xf32>
    %49 = vector.broadcast %48 : vector<1x256xf32> to vector<256x256xf32>
    %50 = arith.addf %47, %49 : vector<256x256xf32>
    %c0_24 = arith.constant 0 : index
    %c0_25 = arith.constant 0 : index
    %51 = vector.load %arg8[%c0_24, %c0_25] : memref<256x256xf32, #tpu.memory_space<vmem>>, vector<256x256xf32>
    tpu.vector_store %arg8[%c0_24, %c0_25], %50 {strides = array<i32>} : memref<256x256xf32, #tpu.memory_space<vmem>>, vector<256x256xf32>,
    return
  }
  func.func @transform_0(%arg0: i32) -> (i32, i32) {
    %c0_i32 = arith.constant 0 : i32
    %c0_i32_0 = arith.constant 0 : i32
    return %arg0, %c0_i32 : i32, i32
  }
  func.func @transform_1(%arg0: i32) -> (i32, i32) {
    %c0_i32 = arith.constant 0 : i32
    %c0_i32_0 = arith.constant 0 : i32
    %c0_i32_1 = arith.constant 0 : i32
    return %c0_i32, %c0_i32_0 : i32, i32
  }
  func.func @transform_2(%arg0: i32) -> (i32, i32) {
    %c0_i32 = arith.constant 0 : i32
    %c0_i32_0 = arith.constant 0 : i32
    %c0_i32_1 = arith.constant 0 : i32
    return %c0_i32, %c0_i32_0 : i32, i32
  }
  func.func @transform_3(%arg0: i32) -> (i32, i32) {
    %c0_i32 = arith.constant 0 : i32
    %c0_i32_0 = arith.constant 0 : i32
    %c0_i32_1 = arith.constant 0 : i32
    return %c0_i32, %c0_i32_0 : i32, i32
  }
  func.func @transform_4(%arg0: i32) -> (i32, i32) {
    %c0_i32 = arith.constant 0 : i32
    %c0_i32_0 = arith.constant 0 : i32
    %c0_i32_1 = arith.constant 0 : i32
    return %c0_i32, %c0_i32_0 : i32, i32
  }
  func.func @transform_5(%arg0: i32) -> (i32, i32) {
    %c0_i32 = arith.constant 0 : i32
    %c0_i32_0 = arith.constant 0 : i32
    %c0_i32_1 = arith.constant 0 : i32
    return %c0_i32, %c0_i32_0 : i32, i32
  }
  func.func @transform_6(%arg0: i32) -> (i32, i32) {
    %c0_i32 = arith.constant 0 : i32
    %c0_i32_0 = arith.constant 0 : i32
    %c0_i32_1 = arith.constant 0 : i32
    return %c0_i32, %c0_i32_0 : i32, i32
  }
  func.func @transform_7(%arg0: i32) -> (i32, i32) {
    %c0_i32 = arith.constant 0 : i32
    %c0_i32_0 = arith.constant 0 : i32
    return %arg0, %c0_i32 : i32, i32
  }
}

</mosaic_0001>

<llo_original>
// kernel: tpu_custom_call.1
$region0: #{tpu_custom_call.1}
  #allocation0 [shape = 'u32[]', space=smem, size = 0x4, offset = 0x4, fixed_abs, tag = 'smem constant byte address 0x4 - core index']
  #allocation1 [shape = 'u32[144,128]{1,0:T(1,128)}', space=vmem, size = 0x12000, scoped, tag = 'internal scratch']
  %s0 = inlined_call_operand.hbm [shape: f32[512,256], index: 0, kind: input, shape index: {}]
  %s1 = inlined_call_operand.hbm [shape: f32[256,256], index: 1, kind: input, shape index: {}]
  %s2 = inlined_call_operand.vmem [shape: f32[1,256], index: 2, kind: input, shape index: {}]
  %s3 = inlined_call_operand.hbm [shape: f32[256,256], index: 3, kind: input, shape index: {}]
  %s4 = inlined_call_operand.vmem [shape: f32[1,256], index: 4, kind: input, shape index: {}]
  %s5 = inlined_call_operand.vmem [shape: f32[1,256], index: 5, kind: input, shape index: {}]
  %s6 = inlined_call_operand.vmem [shape: f32[1,256], index: 6, kind: input, shape index: {}]
  %s7 = inlined_call_operand.hbm [shape: f32[512,256], index: 7, kind: output, shape index: {}]
  %s8 = sld [smem:[#allocation0]]
  $region73: #{tpu_custom_call.1} parent=0
    _
  %s10 = ssub.s32 1, %s8
  %s11 = scalar_select 0, %s10, %s8
  $region1: #{tpu_custom_call.1} parent=0
    #allocation2 [shape = 'u8[524288]{0}', space=vmem, size = 0x80000, scoped, tag = 'input window, operand 0']
    #allocation3 [shape = 's32[2]{0}', space=sflag, size = 0x8, scoped, tag = 'scoped memory for tpu_custom_call.1']
    #allocation4 [shape = 's32[2]{0}', space=sflag, size = 0x8, scoped, tag = 'scoped memory for tpu_custom_call.1']
    #allocation5 [shape = 'u8[262144]{0}', space=vmem, size = 0x40000, scoped, tag = 'input window, operand 1, single buffered']
    #allocation6 [shape = 's32[1]{0}', space=sflag, size = 0x4, scoped, tag = 'scoped memory for tpu_custom_call.1']
    #allocation7 [shape = 'u8[262144]{0}', space=vmem, size = 0x40000, scoped, tag = 'input window, operand 3, single buffered']
    #allocation8 [shape = 'u8[524288]{0}', space=vmem, size = 0x80000, scoped, tag = 'output window, operand 0']
    %12 = vsyncpa [#allocation3], 0
    %s13 = scalar_lea.sflag [#allocation3], 1
    %14 = vsyncpa %s13, 0
    %15 = vsyncpa [#allocation6], 0
    %16 = vsyncpa [#allocation4], 0
    %s17 = scalar_lea.sflag [#allocation4], 1
    %18 = vsyncpa %s17, 0
    loop: start=0, step=1, limit=4
    $region2: #{tpu_custom_call.1} parent=1 // loop_pre_header
      _
    $region3: #{tpu_custom_call.1} parent=1 // loop_header
      %s20 = sphi 0, %s24
      %p21 = scmp.ge.s32.totalorder %s20, 4
      %s30 = sphi 0, %s32
      %s33 = sphi 0, %s30
      %s34 = sphi 0, %s33
      %s50 = sphi 0, %s34
      %s54 = sphi 0, %s54
      %s56 = sphi 0, %s54
      %s57 = sphi 0, %s56
      %s71 = sphi 0, %s57
      %s75 = sphi 0, %s75
      %s77 = sphi 0, %s75
      %s78 = sphi 0, %s77
      %s92 = sphi 0, %s78
      %s96 = sphi 0, %s96
      %s98 = sphi 0, %s96
      %s99 = sphi 0, %s98
      %s113 = sphi 0, %s99
      %s117 = sphi 0, %s117
      %s119 = sphi 0, %s117
      %s120 = sphi 0, %s119
      %s134 = sphi 0, %s120
      %s138 = sphi 0, %s138
      %s140 = sphi 0, %s138
      %s141 = sphi 0, %s140
      %s155 = sphi 0, %s141
      %s159 = sphi 0, %s159
      %s161 = sphi 0, %s159
      %s162 = sphi 0, %s161
      %s176 = sphi 0, %s162
      %s182 = sphi 0, %s184
      %s185 = sphi 0, %s182
      %s186 = sphi 0, %s185
      %s202 = sphi 0, %s186
    $region4: #{tpu_custom_call.1} parent=1 // loop_header_branch
      %23 = sbr.rel (%p21) target = $region8
    $region5: #{tpu_custom_call.1} parent=1 // loop_body
      %s25 = ssub.s32 %s20, 1
      %s26 = ssub.s32 %s20, 2
      %s27 = sadd.s32 %s20, 1
      %s28 = ssub.s32 %s20, %s27
      %p29 = scmp.eq.s32.totalorder %s28, 0
      %s31 = sadd.s32 %s30, 1
      %s32 = scalar_select %p29, %s30, %s31
      %p35 = pneg %p29
      %p36 = scmp.eq.s32.totalorder %s20, 1
      %p37 = por %p35, %p36
      %p38 = scmp.ne.s32.totalorder %s30, %s33
      %p39 = scmp.eq.s32.totalorder %s20, 0
      %p40 = por %p38, %p39
      %p41 = scmp.ne.s32.totalorder %s30, %s33
      %p42 = scmp.eq.s32.totalorder %s25, 1
      %p43 = por %p41, %p42
      %p44 = scmp.ne.s32.totalorder %s33, %s34
      %p45 = scmp.eq.s32.totalorder %s25, 0
      %p46 = por %p44, %p45
      %p47 = scmp.ne.s32.totalorder %s33, %s34
      %p48 = scmp.eq.s32.totalorder %s26, 1
      %p49 = por %p47, %p48
      %p51 = scmp.ne.s32.totalorder %s34, %s50
      %p52 = scmp.eq.s32.totalorder %s26, 0
      %p53 = por %p51, %p52
      %s55 = sadd.s32 %s54, 1
      %p58 = scmp.eq.s32.totalorder %s20, 1
      %p59 = scmp.ne.s32.totalorder %s54, %s56
      %p60 = scmp.eq.s32.totalorder %s20, 0
      %p61 = por %p59, %p60
      %p62 = scmp.ne.s32.totalorder %s54, %s56
      %p63 = scmp.eq.s32.totalorder %s25, 1
      %p64 = por %p62, %p63
      %p65 = scmp.ne.s32.totalorder %s56, %s57
      %p66 = scmp.eq.s32.totalorder %s25, 0
      %p67 = por %p65, %p66
      %p68 = scmp.ne.s32.totalorder %s56, %s57
      %p69 = scmp.eq.s32.totalorder %s26, 1
      %p70 = por %p68, %p69
      %p72 = scmp.ne.s32.totalorder %s57, %s71
      %p73 = scmp.eq.s32.totalorder %s26, 0
      %p74 = por %p72, %p73
      %s76 = sadd.s32 %s75, 1
      %p79 = scmp.eq.s32.totalorder %s20, 1
      %p80 = scmp.ne.s32.totalorder %s75, %s77
      %p81 = scmp.eq.s32.totalorder %s20, 0
      %p82 = por %p80, %p81
      %p83 = scmp.ne.s32.totalorder %s75, %s77
      %p84 = scmp.eq.s32.totalorder %s25, 1
      %p85 = por %p83, %p84
      %p86 = scmp.ne.s32.totalorder %s77, %s78
      %p87 = scmp.eq.s32.totalorder %s25, 0
      %p88 = por %p86, %p87
      %p89 = scmp.ne.s32.totalorder %s77, %s78
      %p90 = scmp.eq.s32.totalorder %s26, 1
      %p91 = por %p89, %p90
      %p93 = scmp.ne.s32.totalorder %s78, %s92
      %p94 = scmp.eq.s32.totalorder %s26, 0
      %p95 = por %p93, %p94
      %s97 = sadd.s32 %s96, 1
      %p100 = scmp.eq.s32.totalorder %s20, 1
      %p101 = scmp.ne.s32.totalorder %s96, %s98
      %p102 = scmp.eq.s32.totalorder %s20, 0
      %p103 = por %p101, %p102
      %p104 = scmp.ne.s32.totalorder %s96, %s98
      %p105 = scmp.eq.s32.totalorder %s25, 1
      %p106 = por %p104, %p105
      %p107 = scmp.ne.s32.totalorder %s98, %s99
      %p108 = scmp.eq.s32.totalorder %s25, 0
      %p109 = por %p107, %p108
      %p110 = scmp.ne.s32.totalorder %s98, %s99
      %p111 = scmp.eq.s32.totalorder %s26, 1
      %p112 = por %p110, %p111
      %p114 = scmp.ne.s32.totalorder %s99, %s113
      %p115 = scmp.eq.s32.totalorder %s26, 0
      %p116 = por %p114, %p115
      %s118 = sadd.s32 %s117, 1
      %p121 = scmp.eq.s32.totalorder %s20, 1
      %p122 = scmp.ne.s32.totalorder %s117, %s119
      %p123 = scmp.eq.s32.totalorder %s20, 0
      %p124 = por %p122, %p123
      %p125 = scmp.ne.s32.totalorder %s117, %s119
      %p126 = scmp.eq.s32.totalorder %s25, 1
      %p127 = por %p125, %p126
      %p128 = scmp.ne.s32.totalorder %s119, %s120
      %p129 = scmp.eq.s32.totalorder %s25, 0
      %p130 = por %p128, %p129
      %p131 = scmp.ne.s32.totalorder %s119, %s120
      %p132 = scmp.eq.s32.totalorder %s26, 1
      %p133 = por %p131, %p132
      %p135 = scmp.ne.s32.totalorder %s120, %s134
      %p136 = scmp.eq.s32.totalorder %s26, 0
      %p137 = por %p135, %p136
      %s139 = sadd.s32 %s138, 1
      %p142 = scmp.eq.s32.totalorder %s20, 1
      %p143 = scmp.ne.s32.totalorder %s138, %s140
      %p144 = scmp.eq.s32.totalorder %s20, 0
      %p145 = por %p143, %p144
      %p146 = scmp.ne.s32.totalorder %s138, %s140
      %p147 = scmp.eq.s32.totalorder %s25, 1
      %p148 = por %p146, %p147
      %p149 = scmp.ne.s32.totalorder %s140, %s141
      %p150 = scmp.eq.s32.totalorder %s25, 0
      %p151 = por %p149, %p150
      %p152 = scmp.ne.s32.totalorder %s140, %s141
      %p153 = scmp.eq.s32.totalorder %s26, 1
      %p154 = por %p152, %p153
      %p156 = scmp.ne.s32.totalorder %s141, %s155
      %p157 = scmp.eq.s32.totalorder %s26, 0
      %p158 = por %p156, %p157
      %s160 = sadd.s32 %s159, 1
      %p163 = scmp.eq.s32.totalorder %s20, 1
      %p164 = scmp.ne.s32.totalorder %s159, %s161
      %p165 = scmp.eq.s32.totalorder %s20, 0
      %p166 = por %p164, %p165
      %p167 = scmp.ne.s32.totalorder %s159, %s161
      %p168 = scmp.eq.s32.totalorder %s25, 1
      %p169 = por %p167, %p168
      %p170 = scmp.ne.s32.totalorder %s161, %s162
      %p171 = scmp.eq.s32.totalorder %s25, 0
      %p172 = por %p170, %p171
      %p173 = scmp.ne.s32.totalorder %s161, %s162
      %p174 = scmp.eq.s32.totalorder %s26, 1
      %p175 = por %p173, %p174
      %p177 = scmp.ne.s32.totalorder %s162, %s176
      %p178 = scmp.eq.s32.totalorder %s26, 0
      %p179 = por %p177, %p178
      %s180 = ssub.s32 %s20, %s27
      %p181 = scmp.eq.s32.totalorder %s180, 0
      %s183 = sadd.s32 %s182, 1
      %s184 = scalar_select %p181, %s182, %s183
      %p187 = pneg %p181
      %p188 = scmp.eq.s32.totalorder %s20, 1
      %p189 = por %p187, %p188
      %p190 = scmp.ne.s32.totalorder %s182, %s185
      %p191 = scmp.eq.s32.totalorder %s20, 0
      %p192 = por %p190, %p191
      %p193 = scmp.ne.s32.totalorder %s182, %s185
      %p194 = scmp.eq.s32.totalorder %s25, 1
      %p195 = por %p193, %p194
      %p196 = scmp.ne.s32.totalorder %s185, %s186
      %p197 = scmp.eq.s32.totalorder %s25, 0
      %p198 = por %p196, %p197
      %p199 = scmp.ne.s32.totalorder %s185, %s186
      %p200 = scmp.eq.s32.totalorder %s26, 1
      %p201 = por %p199, %p200
      %p203 = scmp.ne.s32.totalorder %s186, %s202
      %p204 = scmp.eq.s32.totalorder %s26, 0
      %p205 = por %p203, %p204
      %p206 = scmp.le.s32.totalorder 1, %s20
      %p207 = scmp.lt.s32.totalorder %s20, 3
      %p208 = pnand %p206, %p207
      %p209 = pneg %p208
      // Predicated region
      $region9: #{tpu_custom_call.1} parent=5 // pred_check
        _
      $region10: #{tpu_custom_call.1} parent=5 // pred_check_branch
        %211 = sbr.rel (%p208) target = $region12
      $region11: #{tpu_custom_call.1} parent=5 // pred_region
        %s212 = ssub.s32 %s20, 1
        // Predicated region
        $region13: #{tpu_custom_call.1} parent=11 // pred_check
          %p213 = pneg %p67
        $region14: #{tpu_custom_call.1} parent=11 // pred_check_branch
          %215 = sbr.rel (%p213) target = $region16
        $region15: #{tpu_custom_call.1} parent=11 // pred_region
          %s217 = ssub.s32 8192, 8192
          %218 = vsyncadd [#allocation6], %s217
          %s219 = sshll.u32 [#allocation5], 4
          %s220 = int_to_ptr.vmem [resolvable:$true] %s219
          %225 = dma.hbm_to_vmem [thread:$0]  %s1, 8192, %s220, [#allocation6], 256, 256, 16
        $region16: #{tpu_custom_call.1} parent=11 // pred_fallthru
          _
        // Predicated region
        $region17: #{tpu_custom_call.1} parent=11 // pred_check
          %p226 = pneg %p88
        $region18: #{tpu_custom_call.1} parent=11 // pred_check_branch
          %228 = sbr.rel (%p226) target = $region20
        $region19: #{tpu_custom_call.1} parent=11 // pred_region
          _
        $region20: #{tpu_custom_call.1} parent=11 // pred_fallthru
          _
        // Predicated region
        $region21: #{tpu_custom_call.1} parent=11 // pred_check
          %p229 = pneg %p109
        $region22: #{tpu_custom_call.1} parent=11 // pred_check_branch
          %231 = sbr.rel (%p229) target = $region24
        $region23: #{tpu_custom_call.1} parent=11 // pred_region
          %s233 = ssub.s32 8192, 8192
          %234 = vsyncadd [#allocation6], %s233
          %s235 = sshll.u32 [#allocation7], 4
          %s236 = int_to_ptr.vmem [resolvable:$true] %s235
          %241 = dma.hbm_to_vmem [thread:$0]  %s3, 8192, %s236, [#allocation6], 256, 256, 16
        $region24: #{tpu_custom_call.1} parent=11 // pred_fallthru
          _
        // Predicated region
        $region25: #{tpu_custom_call.1} parent=11 // pred_check
          %p242 = pneg %p130
        $region26: #{tpu_custom_call.1} parent=11 // pred_check_branch
          %244 = sbr.rel (%p242) target = $region28
        $region27: #{tpu_custom_call.1} parent=11 // pred_region
          _
        $region28: #{tpu_custom_call.1} parent=11 // pred_fallthru
          _
        // Predicated region
        $region29: #{tpu_custom_call.1} parent=11 // pred_check
          %p245 = pneg %p151
        $region30: #{tpu_custom_call.1} parent=11 // pred_check_branch
          %247 = sbr.rel (%p245) target = $region32
        $region31: #{tpu_custom_call.1} parent=11 // pred_region
          _
        $region32: #{tpu_custom_call.1} parent=11 // pred_fallthru
          _
        // Predicated region
        $region33: #{tpu_custom_call.1} parent=11 // pred_check
          %p248 = pneg %p172
        $region34: #{tpu_custom_call.1} parent=11 // pred_check_branch
          %250 = sbr.rel (%p248) target = $region36
        $region35: #{tpu_custom_call.1} parent=11 // pred_region
          _
        $region36: #{tpu_custom_call.1} parent=11 // pred_fallthru
          _
      $region12: #{tpu_custom_call.1} parent=5 // pred_fallthru
        _
      %p251 = scmp.lt.s32.totalorder %s20, 2
      // Predicated region
      $region37: #{tpu_custom_call.1} parent=5 // pred_check
        %p252 = pneg %p251
      $region38: #{tpu_custom_call.1} parent=5 // pred_check_branch
        %254 = sbr.rel (%p252) target = $region40
      $region39: #{tpu_custom_call.1} parent=5 // pred_region
        // Predicated region
        $region41: #{tpu_custom_call.1} parent=39 // pred_check
          %p255 = pneg %p40
        $region42: #{tpu_custom_call.1} parent=39 // pred_check_branch
          %257 = sbr.rel (%p255) target = $region44
        $region43: #{tpu_custom_call.1} parent=39 // pred_region
          %s258 = sand.u32 %s30, 1
          %s259 = scalar_lea.sflag [#allocation3], %s258
          %s260 = sand.u32 %s30, 1
          %s261 = smul.addr %s260, 512
          %s262 = scalar_lea.vmem [#allocation2], %s261
          %s263 = smul.u32 32, %s20
          %s265 = ssub.s32 8192, 8192
          %266 = vsyncadd %s259, %s265
          %s267 = smul.addr %s263, 2
          %s268 = smul.addr %s267, 128
          %s269 = scalar_lea.hbm %s0, %s268
          %s270 = sshll.u32 %s262, 4
          %s271 = int_to_ptr.vmem [resolvable:$true] %s270
          %276 = dma.hbm_to_vmem [thread:$0]  %s269, 8192, %s271, %s259, 256, 256, 16
        $region44: #{tpu_custom_call.1} parent=39 // pred_fallthru
          _
      $region40: #{tpu_custom_call.1} parent=5 // pred_fallthru
        _
      %p277 = scmp.le.s32.totalorder 1, %s20
      %p278 = scmp.lt.s32.totalorder %s20, 3
      %p279 = pnand %p277, %p278
      %p280 = pneg %p279
      // Predicated region
      $region45: #{tpu_custom_call.1} parent=5 // pred_check
        _
      $region46: #{tpu_custom_call.1} parent=5 // pred_check_branch
        %282 = sbr.rel (%p279) target = $region48
      $region47: #{tpu_custom_call.1} parent=5 // pred_region
        %s283 = ssub.s32 %s20, 1
        %s284 = sand.u32 %s33, 1
        %s285 = scalar_lea.sflag [#allocation3], %s284
        %s286 = sand.u32 %s33, 1
        %s287 = smul.addr %s286, 512
        %s288 = scalar_lea.vmem [#allocation2], %s287
        // Predicated region
        $region49: #{tpu_custom_call.1} parent=47 // pred_check
          %p289 = pneg %p46
        $region50: #{tpu_custom_call.1} parent=47 // pred_check_branch
          %291 = sbr.rel (%p289) target = $region52
        $region51: #{tpu_custom_call.1} parent=47 // pred_region
          %292 = dma.done %s285, 8192
        $region52: #{tpu_custom_call.1} parent=47 // pred_fallthru
          _
        // Predicated region
        $region53: #{tpu_custom_call.1} parent=47 // pred_check
          %p293 = pneg %p67
        $region54: #{tpu_custom_call.1} parent=47 // pred_check_branch
          %295 = sbr.rel (%p293) target = $region56
        $region55: #{tpu_custom_call.1} parent=47 // pred_region
          %296 = dma.done [#allocation6], 8192
        $region56: #{tpu_custom_call.1} parent=47 // pred_fallthru
          _
        // Predicated region
        $region57: #{tpu_custom_call.1} parent=47 // pred_check
          %p297 = pneg %p109
        $region58: #{tpu_custom_call.1} parent=47 // pred_check_branch
          %299 = sbr.rel (%p297) target = $region60
        $region59: #{tpu_custom_call.1} parent=47 // pred_region
          %300 = dma.done [#allocation6], 8192
        $region60: #{tpu_custom_call.1} parent=47 // pred_fallthru
          _
        %s301 = sand.u32 %s33, 1
        %s302 = scalar_lea.sflag [#allocation3], %s301
        %s303 = sand.u32 %s33, 1
        %s304 = smul.addr %s303, 512
        %s305 = scalar_lea.vmem [#allocation2], %s304
        %p306 = pneg %p46
        %p307 = pneg %p43
        %p308 = pneg %p67
        %p309 = pneg %p64
        %p310 = pneg %p88
        %p311 = pneg %p85
        %p312 = pneg %p109
        %p313 = pneg %p106
        %p314 = pneg %p130
        %p315 = pneg %p127
        %p316 = pneg %p151
        %p317 = pneg %p148
        %p318 = pneg %p172
        %p319 = pneg %p169
        %p320 = pneg %p198
        %p321 = pneg %p195
        %s322 = sand.u32 %s185, 1
        %s323 = scalar_lea.sflag [#allocation4], %s322
        %s324 = sand.u32 %s185, 1
        %s325 = smul.addr %s324, 512
        %s326 = scalar_lea.vmem [#allocation8], %s325
        %s327 = smul.u32 32, %s25
        %s328 = smul.u32 32, %s25
        %v329 = vld [vmem:[%s288] sm:$0xff]
        %v330 = vld [vmem:[%s288 + $0x8] sm:$0xff]
        %v331 = vld [vmem:[%s288 + $0x10] sm:$0xff]
        %v332 = vld [vmem:[%s288 + $0x18] sm:$0xff]
        %v333 = vld [vmem:[%s288 + $0x20] sm:$0xff]
        %v334 = vld [vmem:[%s288 + $0x28] sm:$0xff]
        %v335 = vld [vmem:[%s288 + $0x30] sm:$0xff]
        %v336 = vld [vmem:[%s288 + $0x38] sm:$0xff]
        %v337 = vld [vmem:[%s288 + $0x40] sm:$0xff]
        %v338 = vld [vmem:[%s288 + $0x48] sm:$0xff]
        %v339 = vld [vmem:[%s288 + $0x50] sm:$0xff]
        %v340 = vld [vmem:[%s288 + $0x58] sm:$0xff]
        %v341 = vld [vmem:[%s288 + $0x60] sm:$0xff]
        %v342 = vld [vmem:[%s288 + $0x68] sm:$0xff]
        %v343 = vld [vmem:[%s288 + $0x70] sm:$0xff]
        %v344 = vld [vmem:[%s288 + $0x78] sm:$0xff]
        %v345 = vld [vmem:[%s288 + $0x80] sm:$0xff]
        %v346 = vld [vmem:[%s288 + $0x88] sm:$0xff]
        %v347 = vld [vmem:[%s288 + $0x90] sm:$0xff]
        %v348 = vld [vmem:[%s288 + $0x98] sm:$0xff]
        %v349 = vld [vmem:[%s288 + $0xa0] sm:$0xff]
        %v350 = vld [vmem:[%s288 + $0xa8] sm:$0xff]
        %v351 = vld [vmem:[%s288 + $0xb0] sm:$0xff]
        %v352 = vld [vmem:[%s288 + $0xb8] sm:$0xff]
        %v353 = vld [vmem:[%s288 + $0xc0] sm:$0xff]
        %v354 = vld [vmem:[%s288 + $0xc8] sm:$0xff]
        %v355 = vld [vmem:[%s288 + $0xd0] sm:$0xff]
        %v356 = vld [vmem:[%s288 + $0xd8] sm:$0xff]
        %v357 = vld [vmem:[%s288 + $0xe0] sm:$0xff]
        %v358 = vld [vmem:[%s288 + $0xe8] sm:$0xff]
        %v359 = vld [vmem:[%s288 + $0xf0] sm:$0xff]
        %v360 = vld [vmem:[%s288 + $0xf8] sm:$0xff]
        %v361 = vld [vmem:[%s288 + $0x100] sm:$0xff]
        %v362 = vld [vmem:[%s288 + $0x108] sm:$0xff]
        %v363 = vld [vmem:[%s288 + $0x110] sm:$0xff]
        %v364 = vld [vmem:[%s288 + $0x118] sm:$0xff]
        %v365 = vld [vmem:[%s288 + $0x120] sm:$0xff]
        %v366 = vld [vmem:[%s288 + $0x128] sm:$0xff]
        %v367 = vld [vmem:[%s288 + $0x130] sm:$0xff]
        %v368 = vld [vmem:[%s288 + $0x138] sm:$0xff]
        %v369 = vld [vmem:[%s288 + $0x140] sm:$0xff]
        %v370 = vld [vmem:[%s288 + $0x148] sm:$0xff]
        %v371 = vld [vmem:[%s288 + $0x150] sm:$0xff]
        %v372 = vld [vmem:[%s288 + $0x158] sm:$0xff]
        %v373 = vld [vmem:[%s288 + $0x160] sm:$0xff]
        %v374 = vld [vmem:[%s288 + $0x168] sm:$0xff]
        %v375 = vld [vmem:[%s288 + $0x170] sm:$0xff]
        %v376 = vld [vmem:[%s288 + $0x178] sm:$0xff]
        %v377 = vld [vmem:[%s288 + $0x180] sm:$0xff]
        %v378 = vld [vmem:[%s288 + $0x188] sm:$0xff]
        %v379 = vld [vmem:[%s288 + $0x190] sm:$0xff]
        %v380 = vld [vmem:[%s288 + $0x198] sm:$0xff]
        %v381 = vld [vmem:[%s288 + $0x1a0] sm:$0xff]
        %v382 = vld [vmem:[%s288 + $0x1a8] sm:$0xff]
        %v383 = vld [vmem:[%s288 + $0x1b0] sm:$0xff]
        %v384 = vld [vmem:[%s288 + $0x1b8] sm:$0xff]
        %v385 = vld [vmem:[%s288 + $0x1c0] sm:$0xff]
        %v386 = vld [vmem:[%s288 + $0x1c8] sm:$0xff]
        %v387 = vld [vmem:[%s288 + $0x1d0] sm:$0xff]
        %v388 = vld [vmem:[%s288 + $0x1d8] sm:$0xff]
        %v389 = vld [vmem:[%s288 + $0x1e0] sm:$0xff]
        %v390 = vld [vmem:[%s288 + $0x1e8] sm:$0xff]
        %v391 = vld [vmem:[%s288 + $0x1f0] sm:$0xff]
        %v392 = vld [vmem:[%s288 + $0x1f8] sm:$0xff]
        %v393 = vld [vmem:[#allocation5] sm:$0xff]
        %v394 = vld [vmem:[#allocation5 + $0x8] sm:$0xff]
        %v395 = vld [vmem:[#allocation5 + $0x10] sm:$0xff]
        %v396 = vld [vmem:[#allocation5 + $0x18] sm:$0xff]
        %v397 = vld [vmem:[#allocation5 + $0x20] sm:$0xff]
        %v398 = vld [vmem:[#allocation5 + $0x28] sm:$0xff]
        %v399 = vld [vmem:[#allocation5 + $0x30] sm:$0xff]
        %v400 = vld [vmem:[#allocation5 + $0x38] sm:$0xff]
        %v401 = vld [vmem:[#allocation5 + $0x40] sm:$0xff]
        %v402 = vld [vmem:[#allocation5 + $0x48] sm:$0xff]
        %v403 = vld [vmem:[#allocation5 + $0x50] sm:$0xff]
        %v404 = vld [vmem:[#allocation5 + $0x58] sm:$0xff]
        %v405 = vld [vmem:[#allocation5 + $0x60] sm:$0xff]
        %v406 = vld [vmem:[#allocation5 + $0x68] sm:$0xff]
        %v407 = vld [vmem:[#allocation5 + $0x70] sm:$0xff]
        %v408 = vld [vmem:[#allocation5 + $0x78] sm:$0xff]
        %v409 = vld [vmem:[#allocation5 + $0x80] sm:$0xff]
        %v410 = vld [vmem:[#allocation5 + $0x88] sm:$0xff]
        %v411 = vld [vmem:[#allocation5 + $0x90] sm:$0xff]
        %v412 = vld [vmem:[#allocation5 + $0x98] sm:$0xff]
        %v413 = vld [vmem:[#allocation5 + $0xa0] sm:$0xff]
        %v414 = vld [vmem:[#allocation5 + $0xa8] sm:$0xff]
        %v415 = vld [vmem:[#allocation5 + $0xb0] sm:$0xff]
        %v416 = vld [vmem:[#allocation5 + $0xb8] sm:$0xff]
        %v417 = vld [vmem:[#allocation5 + $0xc0] sm:$0xff]
        %v418 = vld [vmem:[#allocation5 + $0xc8] sm:$0xff]
        %v419 = vld [vmem:[#allocation5 + $0xd0] sm:$0xff]
        %v420 = vld [vmem:[#allocation5 + $0xd8] sm:$0xff]
        %v421 = vld [vmem:[#allocation5 + $0xe0] sm:$0xff]
        %v422 = vld [vmem:[#allocation5 + $0xe8] sm:$0xff]
        %v423 = vld [vmem:[#allocation5 + $0xf0] sm:$0xff]
        %v424 = vld [vmem:[#allocation5 + $0xf8] sm:$0xff]
        %v425 = vld [vmem:[#allocation5 + $0x100] sm:$0xff]
        %v426 = vld [vmem:[#allocation5 + $0x108] sm:$0xff]
        %v427 = vld [vmem:[#allocation5 + $0x110] sm:$0xff]
        %v428 = vld [vmem:[#allocation5 + $0x118] sm:$0xff]
        %v429 = vld [vmem:[#allocation5 + $0x120] sm:$0xff]
        %v430 = vld [vmem:[#allocation5 + $0x128] sm:$0xff]
        %v431 = vld [vmem:[#allocation5 + $0x130] sm:$0xff]
        %v432 = vld [vmem:[#allocation5 + $0x138] sm:$0xff]
        %v433 = vld [vmem:[#allocation5 + $0x140] sm:$0xff]
        %v434 = vld [vmem:[#allocation5 + $0x148] sm:$0xff]
        %v435 = vld [vmem:[#allocation5 + $0x150] sm:$0xff]
        %v436 = vld [vmem:[#allocation5 + $0x158] sm:$0xff]
        %v437 = vld [vmem:[#allocation5 + $0x160] sm:$0xff]
        %v438 = vld [vmem:[#allocation5 + $0x168] sm:$0xff]
        %v439 = vld [vmem:[#allocation5 + $0x170] sm:$0xff]
        %v440 = vld [vmem:[#allocation5 + $0x178] sm:$0xff]
        %v441 = vld [vmem:[#allocation5 + $0x180] sm:$0xff]
        %v442 = vld [vmem:[#allocation5 + $0x188] sm:$0xff]
        %v443 = vld [vmem:[#allocation5 + $0x190] sm:$0xff]
        %v444 = vld [vmem:[#allocation5 + $0x198] sm:$0xff]
        %v445 = vld [vmem:[#allocation5 + $0x1a0] sm:$0xff]
        %v446 = vld [vmem:[#allocation5 + $0x1a8] sm:$0xff]
        %v447 = vld [vmem:[#allocation5 + $0x1b0] sm:$0xff]
        %v448 = vld [vmem:[#allocation5 + $0x1b8] sm:$0xff]
        %v449 = vld [vmem:[#allocation5 + $0x1c0] sm:$0xff]
        %v450 = vld [vmem:[#allocation5 + $0x1c8] sm:$0xff]
        %v451 = vld [vmem:[#allocation5 + $0x1d0] sm:$0xff]
        %v452 = vld [vmem:[#allocation5 + $0x1d8] sm:$0xff]
        %v453 = vld [vmem:[#allocation5 + $0x1e0] sm:$0xff]
        %v454 = vld [vmem:[#allocation5 + $0x1e8] sm:$0xff]
        %v455 = vld [vmem:[#allocation5 + $0x1f0] sm:$0xff]
        %v456 = vld [vmem:[#allocation5 + $0x1f8] sm:$0xff]
        %v457 = vld [vmem:[%s2] sm:$0x3]
        %v459 = vlaneseq
        %v460 = vshrl.u32 %v459, 7
        %v461 = vsub.s32 0, %v460
        %v462 = vrot.slane %v457, %v461
        %v463 = vlaneseq
        %v464 = vshrl.u32 %v463, 7
        %v465 = vsub.s32 1, %v464
        %v466 = vrot.slane %v457, %v465
        %469 = vmatprep.subr.mxu0 %v424
        %470 = vmatpush1.msra.mxu0 %v423
        %471 = vmatprep.subr.mxu0 %v422
        %472 = vmatpush1.msra.mxu0 %v421
        %473 = vmatprep.subr.mxu0 %v420
        %474 = vmatpush1.msra.mxu0 %v419
        %475 = vmatprep.subr.mxu0 %v418
        %476 = vmatpush1.msra.mxu0 %v417
        %477 = vmatprep.subr.mxu0 %v416
        %478 = vmatpush1.msra.mxu0 %v415
        %479 = vmatprep.subr.mxu0 %v414
        %480 = vmatpush1.msra.mxu0 %v413
        %481 = vmatprep.subr.mxu0 %v412
        %482 = vmatpush1.msra.mxu0 %v411
        %483 = vmatprep.subr.mxu0 %v410
        %484 = vmatpush1.msra.mxu0 %v409
        %485 = vmatprep.subr.mxu0 %v408
        %486 = vmatpush1.msra.mxu0 %v407
        %487 = vmatprep.subr.mxu0 %v406
        %488 = vmatpush1.msra.mxu0 %v405
        %489 = vmatprep.subr.mxu0 %v404
        %490 = vmatpush1.msra.mxu0 %v403
        %491 = vmatprep.subr.mxu0 %v402
        %492 = vmatpush1.msra.mxu0 %v401
        %493 = vmatprep.subr.mxu0 %v400
        %494 = vmatpush1.msra.mxu0 %v399
        %495 = vmatprep.subr.mxu0 %v398
        %496 = vmatpush1.msra.mxu0 %v397
        %497 = vmatprep.subr.mxu0 %v396
        %498 = vmatpush1.msra.mxu0 %v395
        %499 = vmatprep.subr.mxu0 %v394
        %500 = vmatpush1.msra.mxu0 %v393
        %501 = vmatprep.subr.mxu0 %v456
        %502 = vmatpush2.msra.mxu0 %v455
        %503 = vmatprep.subr.mxu0 %v454
        %504 = vmatpush2.msra.mxu0 %v453
        %505 = vmatprep.subr.mxu0 %v452
        %506 = vmatpush2.msra.mxu0 %v451
        %507 = vmatprep.subr.mxu0 %v450
        %508 = vmatpush2.msra.mxu0 %v449
        %509 = vmatprep.subr.mxu0 %v448
        %510 = vmatpush2.msra.mxu0 %v447
        %511 = vmatprep.subr.mxu0 %v446
        %512 = vmatpush2.msra.mxu0 %v445
        %513 = vmatprep.subr.mxu0 %v444
        %514 = vmatpush2.msra.mxu0 %v443
        %515 = vmatprep.subr.mxu0 %v442
        %516 = vmatpush2.msra.mxu0 %v441
        %517 = vmatprep.subr.mxu0 %v440
        %518 = vmatpush2.msra.mxu0 %v439
        %519 = vmatprep.subr.mxu0 %v438
        %520 = vmatpush2.msra.mxu0 %v437
        %521 = vmatprep.subr.mxu0 %v436
        %522 = vmatpush2.msra.mxu0 %v435
        %523 = vmatprep.subr.mxu0 %v434
        %524 = vmatpush2.msra.mxu0 %v433
        %525 = vmatprep.subr.mxu0 %v432
        %526 = vmatpush2.msra.mxu0 %v431
        %527 = vmatprep.subr.mxu0 %v430
        %528 = vmatpush2.msra.mxu0 %v429
        %529 = vmatprep.subr.mxu0 %v428
        %530 = vmatpush2.msra.mxu0 %v427
        %531 = vmatprep.subr.mxu0 %v426
        %532 = vmatpush2.msra.mxu0 %v425
        %533 = vmatprep.mubr.f32.mxu0 %v330
        %534 = vmatmul.mubr.f32.gmra.mxu0 %v329
        %v535 = vpop.f32.mrf.mxu0
        %v536 = vadd.f32 %v462, %v535
        %v537 = vpop.f32.mrf.mxu0
        %v538 = vadd.f32 %v466, %v537
        %539 = vmatprep.mubr.f32.mxu0 %v332
        %540 = vmatmul.mubr.f32.gmra.mxu0 %v331
        %v541 = vpop.f32.mrf.mxu0
        %v542 = vadd.f32 %v462, %v541
        %v543 = vpop.f32.mrf.mxu0
        %v544 = vadd.f32 %v466, %v543
        %545 = vmatprep.mubr.f32.mxu0 %v334
        %546 = vmatmul.mubr.f32.gmra.mxu0 %v333
        %v547 = vpop.f32.mrf.mxu0
        %v548 = vadd.f32 %v462, %v547
        %v549 = vpop.f32.mrf.mxu0
        %v550 = vadd.f32 %v466, %v549
        %551 = vmatprep.mubr.f32.mxu0 %v336
        %552 = vmatmul.mubr.f32.gmra.mxu0 %v335
        %v553 = vpop.f32.mrf.mxu0
        %v554 = vadd.f32 %v462, %v553
        %v555 = vpop.f32.mrf.mxu0
        %v556 = vadd.f32 %v466, %v555
        %557 = vmatprep.mubr.f32.mxu0 %v338
        %558 = vmatmul.mubr.f32.gmra.mxu0 %v337
        %v559 = vpop.f32.mrf.mxu0
        %v560 = vadd.f32 %v462, %v559
        %v561 = vpop.f32.mrf.mxu0
        %v562 = vadd.f32 %v466, %v561
        %563 = vmatprep.mubr.f32.mxu0 %v340
        %564 = vmatmul.mubr.f32.gmra.mxu0 %v339
        %v565 = vpop.f32.mrf.mxu0
        %v566 = vadd.f32 %v462, %v565
        %v567 = vpop.f32.mrf.mxu0
        %v568 = vadd.f32 %v466, %v567
        %569 = vmatprep.mubr.f32.mxu0 %v342
        %570 = vmatmul.mubr.f32.gmra.mxu0 %v341
        %v571 = vpop.f32.mrf.mxu0
        %v572 = vadd.f32 %v462, %v571
        %v573 = vpop.f32.mrf.mxu0
        %v574 = vadd.f32 %v466, %v573
        %575 = vmatprep.mubr.f32.mxu0 %v344
        %576 = vmatmul.mubr.f32.gmra.mxu0 %v343
        %v577 = vpop.f32.mrf.mxu0
        %v578 = vadd.f32 %v462, %v577
        %v579 = vpop.f32.mrf.mxu0
        %v580 = vadd.f32 %v466, %v579
        %581 = vmatprep.mubr.f32.mxu0 %v346
        %582 = vmatmul.mubr.f32.gmra.mxu0 %v345
        %v583 = vpop.f32.mrf.mxu0
        %v584 = vadd.f32 %v462, %v583
        %v585 = vpop.f32.mrf.mxu0
        %v586 = vadd.f32 %v466, %v585
        %587 = vmatprep.mubr.f32.mxu0 %v348
        %588 = vmatmul.mubr.f32.gmra.mxu0 %v347
        %v589 = vpop.f32.mrf.mxu0
        %v590 = vadd.f32 %v462, %v589
        %v591 = vpop.f32.mrf.mxu0
        %v592 = vadd.f32 %v466, %v591
        %593 = vmatprep.mubr.f32.mxu0 %v350
        %594 = vmatmul.mubr.f32.gmra.mxu0 %v349
        %v595 = vpop.f32.mrf.mxu0
        %v596 = vadd.f32 %v462, %v595
        %v597 = vpop.f32.mrf.mxu0
        %v598 = vadd.f32 %v466, %v597
        %599 = vmatprep.mubr.f32.mxu0 %v352
        %600 = vmatmul.mubr.f32.gmra.mxu0 %v351
        %v601 = vpop.f32.mrf.mxu0
        %v602 = vadd.f32 %v462, %v601
        %v603 = vpop.f32.mrf.mxu0
        %v604 = vadd.f32 %v466, %v603
        %605 = vmatprep.mubr.f32.mxu0 %v354
        %606 = vmatmul.mubr.f32.gmra.mxu0 %v353
        %v607 = vpop.f32.mrf.mxu0
        %v608 = vadd.f32 %v462, %v607
        %v609 = vpop.f32.mrf.mxu0
        %v610 = vadd.f32 %v466, %v609
        %611 = vmatprep.mubr.f32.mxu0 %v356
        %612 = vmatmul.mubr.f32.gmra.mxu0 %v355
        %v613 = vpop.f32.mrf.mxu0
        %v614 = vadd.f32 %v462, %v613
        %v615 = vpop.f32.mrf.mxu0
        %v616 = vadd.f32 %v466, %v615
        %617 = vmatprep.mubr.f32.mxu0 %v358
        %618 = vmatmul.mubr.f32.gmra.mxu0 %v357
        %v619 = vpop.f32.mrf.mxu0
        %v620 = vadd.f32 %v462, %v619
        %v621 = vpop.f32.mrf.mxu0
        %v622 = vadd.f32 %v466, %v621
        %623 = vmatprep.mubr.f32.mxu0 %v360
        %624 = vmatmul.mubr.f32.gmra.mxu0 %v359
        %v625 = vpop.f32.mrf.mxu0
        %v626 = vadd.f32 %v462, %v625
        %v627 = vpop.f32.mrf.mxu0
        %v628 = vadd.f32 %v466, %v627
        %629 = vmatprep.mubr.f32.mxu0 %v362
        %630 = vmatmul.mubr.f32.gmra.mxu0 %v361
        %v631 = vpop.f32.mrf.mxu0
        %v632 = vadd.f32 %v462, %v631
        %v633 = vpop.f32.mrf.mxu0
        %v634 = vadd.f32 %v466, %v633
        %635 = vmatprep.mubr.f32.mxu0 %v364
        %636 = vmatmul.mubr.f32.gmra.mxu0 %v363
        %v637 = vpop.f32.mrf.mxu0
        %v638 = vadd.f32 %v462, %v637
        %v639 = vpop.f32.mrf.mxu0
        %v640 = vadd.f32 %v466, %v639
        %641 = vmatprep.mubr.f32.mxu0 %v366
        %642 = vmatmul.mubr.f32.gmra.mxu0 %v365
        %v643 = vpop.f32.mrf.mxu0
        %v644 = vadd.f32 %v462, %v643
        %v645 = vpop.f32.mrf.mxu0
        %v646 = vadd.f32 %v466, %v645
        %647 = vmatprep.mubr.f32.mxu0 %v368
        %648 = vmatmul.mubr.f32.gmra.mxu0 %v367
        %v649 = vpop.f32.mrf.mxu0
        %v650 = vadd.f32 %v462, %v649
        %v651 = vpop.f32.mrf.mxu0
        %v652 = vadd.f32 %v466, %v651
        %653 = vmatprep.mubr.f32.mxu0 %v370
        %654 = vmatmul.mubr.f32.gmra.mxu0 %v369
        %v655 = vpop.f32.mrf.mxu0
        %v656 = vadd.f32 %v462, %v655
        %v657 = vpop.f32.mrf.mxu0
        %v658 = vadd.f32 %v466, %v657
        %659 = vmatprep.mubr.f32.mxu0 %v372
        %660 = vmatmul.mubr.f32.gmra.mxu0 %v371
        %v661 = vpop.f32.mrf.mxu0
        %v662 = vadd.f32 %v462, %v661
        %v663 = vpop.f32.mrf.mxu0
        %v664 = vadd.f32 %v466, %v663
        %665 = vmatprep.mubr.f32.mxu0 %v374
        %666 = vmatmul.mubr.f32.gmra.mxu0 %v373
        %v667 = vpop.f32.mrf.mxu0
        %v668 = vadd.f32 %v462, %v667
        %v669 = vpop.f32.mrf.mxu0
        %v670 = vadd.f32 %v466, %v669
        %671 = vmatprep.mubr.f32.mxu0 %v376
        %672 = vmatmul.mubr.f32.gmra.mxu0 %v375
        %v673 = vpop.f32.mrf.mxu0
        %v674 = vadd.f32 %v462, %v673
        %v675 = vpop.f32.mrf.mxu0
        %v676 = vadd.f32 %v466, %v675
        %677 = vmatprep.mubr.f32.mxu0 %v378
        %678 = vmatmul.mubr.f32.gmra.mxu0 %v377
        %v679 = vpop.f32.mrf.mxu0
        %v680 = vadd.f32 %v462, %v679
        %v681 = vpop.f32.mrf.mxu0
        %v682 = vadd.f32 %v466, %v681
        %683 = vmatprep.mubr.f32.mxu0 %v380
        %684 = vmatmul.mubr.f32.gmra.mxu0 %v379
        %v685 = vpop.f32.mrf.mxu0
        %v686 = vadd.f32 %v462, %v685
        %v687 = vpop.f32.mrf.mxu0
        %v688 = vadd.f32 %v466, %v687
        %689 = vmatprep.mubr.f32.mxu0 %v382
        %690 = vmatmul.mubr.f32.gmra.mxu0 %v381
        %v691 = vpop.f32.mrf.mxu0
        %v692 = vadd.f32 %v462, %v691
        %v693 = vpop.f32.mrf.mxu0
        %v694 = vadd.f32 %v466, %v693
        %695 = vmatprep.mubr.f32.mxu0 %v384
        %696 = vmatmul.mubr.f32.gmra.mxu0 %v383
        %v697 = vpop.f32.mrf.mxu0
        %v698 = vadd.f32 %v462, %v697
        %v699 = vpop.f32.mrf.mxu0
        %v700 = vadd.f32 %v466, %v699
        %701 = vmatprep.mubr.f32.mxu0 %v386
        %702 = vmatmul.mubr.f32.gmra.mxu0 %v385
        %v703 = vpop.f32.mrf.mxu0
        %v704 = vadd.f32 %v462, %v703
        %v705 = vpop.f32.mrf.mxu0
        %v706 = vadd.f32 %v466, %v705
        %707 = vmatprep.mubr.f32.mxu0 %v388
        %708 = vmatmul.mubr.f32.gmra.mxu0 %v387
        %v709 = vpop.f32.mrf.mxu0
        %v710 = vadd.f32 %v462, %v709
        %v711 = vpop.f32.mrf.mxu0
        %v712 = vadd.f32 %v466, %v711
        %713 = vmatprep.mubr.f32.mxu0 %v390
        %714 = vmatmul.mubr.f32.gmra.mxu0 %v389
        %v715 = vpop.f32.mrf.mxu0
        %v716 = vadd.f32 %v462, %v715
        %v717 = vpop.f32.mrf.mxu0
        %v718 = vadd.f32 %v466, %v717
        %719 = vmatprep.mubr.f32.mxu0 %v392
        %720 = vmatmul.mubr.f32.gmra.mxu0 %v391
        %v721 = vpop.f32.mrf.mxu0
        %v722 = vadd.f32 %v462, %v721
        %v723 = vpop.f32.mrf.mxu0
        %v724 = vadd.f32 %v466, %v723
        %725 = vdwg.mxu0
        %v726 = vmul.f32 %v536, %v536
        %v727 = vmul.f32 %v538, %v538
        %v728 = vmul.f32 %v542, %v542
        %v729 = vmul.f32 %v544, %v544
        %v730 = vmul.f32 %v548, %v548
        %v731 = vmul.f32 %v550, %v550
        %v732 = vmul.f32 %v554, %v554
        %v733 = vmul.f32 %v556, %v556
        %v734 = vmul.f32 %v560, %v560
        %v735 = vmul.f32 %v562, %v562
        %v736 = vmul.f32 %v566, %v566
        %v737 = vmul.f32 %v568, %v568
        %v738 = vmul.f32 %v572, %v572
        %v739 = vmul.f32 %v574, %v574
        %v740 = vmul.f32 %v578, %v578
        %v741 = vmul.f32 %v580, %v580
        %v742 = vmul.f32 %v584, %v584
        %v743 = vmul.f32 %v586, %v586
        %v744 = vmul.f32 %v590, %v590
        %v745 = vmul.f32 %v592, %v592
        %v746 = vmul.f32 %v596, %v596
        %v747 = vmul.f32 %v598, %v598
        %v748 = vmul.f32 %v602, %v602
        %v749 = vmul.f32 %v604, %v604
        %v750 = vmul.f32 %v608, %v608
        %v751 = vmul.f32 %v610, %v610
        %v752 = vmul.f32 %v614, %v614
        %v753 = vmul.f32 %v616, %v616
        %v754 = vmul.f32 %v620, %v620
        %v755 = vmul.f32 %v622, %v622
        %v756 = vmul.f32 %v626, %v626
        %v757 = vmul.f32 %v628, %v628
        %v758 = vmul.f32 %v632, %v632
        %v759 = vmul.f32 %v634, %v634
        %v760 = vmul.f32 %v638, %v638
        %v761 = vmul.f32 %v640, %v640
        %v762 = vmul.f32 %v644, %v644
        %v763 = vmul.f32 %v646, %v646
        %v764 = vmul.f32 %v650, %v650
        %v765 = vmul.f32 %v652, %v652
        %v766 = vmul.f32 %v656, %v656
        %v767 = vmul.f32 %v658, %v658
        %v768 = vmul.f32 %v662, %v662
        %v769 = vmul.f32 %v664, %v664
        %v770 = vmul.f32 %v668, %v668
        %v771 = vmul.f32 %v670, %v670
        %v772 = vmul.f32 %v674, %v674
        %v773 = vmul.f32 %v676, %v676
        %v774 = vmul.f32 %v680, %v680
        %v775 = vmul.f32 %v682, %v682
        %v776 = vmul.f32 %v686, %v686
        %v777 = vmul.f32 %v688, %v688
        %v778 = vmul.f32 %v692, %v692
        %v779 = vmul.f32 %v694, %v694
        %v780 = vmul.f32 %v698, %v698
        %v781 = vmul.f32 %v700, %v700
        %v782 = vmul.f32 %v704, %v704
        %v783 = vmul.f32 %v706, %v706
        %v784 = vmul.f32 %v710, %v710
        %v785 = vmul.f32 %v712, %v712
        %v786 = vmul.f32 %v716, %v716
        %v787 = vmul.f32 %v718, %v718
        %v788 = vmul.f32 %v722, %v722
        %v789 = vmul.f32 %v724, %v724
        %v790 = vmul.f32 %v536, %v726
        %v791 = vmul.f32 %v538, %v727
        %v792 = vmul.f32 %v542, %v728
        %v793 = vmul.f32 %v544, %v729
        %v794 = vmul.f32 %v548, %v730
        %v795 = vmul.f32 %v550, %v731
        %v796 = vmul.f32 %v554, %v732
        %v797 = vmul.f32 %v556, %v733
        %v798 = vmul.f32 %v560, %v734
        %v799 = vmul.f32 %v562, %v735
        %v800 = vmul.f32 %v566, %v736
        %v801 = vmul.f32 %v568, %v737
        %v802 = vmul.f32 %v572, %v738
        %v803 = vmul.f32 %v574, %v739
        %v804 = vmul.f32 %v578, %v740
        %v805 = vmul.f32 %v580, %v741
        %v806 = vmul.f32 %v584, %v742
        %v807 = vmul.f32 %v586, %v743
        %v808 = vmul.f32 %v590, %v744
        %v809 = vmul.f32 %v592, %v745
        %v810 = vmul.f32 %v596, %v746
        %v811 = vmul.f32 %v598, %v747
        %v812 = vmul.f32 %v602, %v748
        %v813 = vmul.f32 %v604, %v749
        %v814 = vmul.f32 %v608, %v750
        %v815 = vmul.f32 %v610, %v751
        %v816 = vmul.f32 %v614, %v752
        %v817 = vmul.f32 %v616, %v753
        %v818 = vmul.f32 %v620, %v754
        %v819 = vmul.f32 %v622, %v755
        %v820 = vmul.f32 %v626, %v756
        %v821 = vmul.f32 %v628, %v757
        %v822 = vmul.f32 %v632, %v758
        %v823 = vmul.f32 %v634, %v759
        %v824 = vmul.f32 %v638, %v760
        %v825 = vmul.f32 %v640, %v761
        %v826 = vmul.f32 %v644, %v762
        %v827 = vmul.f32 %v646, %v763
        %v828 = vmul.f32 %v650, %v764
        %v829 = vmul.f32 %v652, %v765
        %v830 = vmul.f32 %v656, %v766
        %v831 = vmul.f32 %v658, %v767
        %v832 = vmul.f32 %v662, %v768
        %v833 = vmul.f32 %v664, %v769
        %v834 = vmul.f32 %v668, %v770
        %v835 = vmul.f32 %v670, %v771
        %v836 = vmul.f32 %v674, %v772
        %v837 = vmul.f32 %v676, %v773
        %v838 = vmul.f32 %v680, %v774
        %v839 = vmul.f32 %v682, %v775
        %v840 = vmul.f32 %v686, %v776
        %v841 = vmul.f32 %v688, %v777
        %v842 = vmul.f32 %v692, %v778
        %v843 = vmul.f32 %v694, %v779
        %v844 = vmul.f32 %v698, %v780
        %v845 = vmul.f32 %v700, %v781
        %v846 = vmul.f32 %v704, %v782
        %v847 = vmul.f32 %v706, %v783
        %v848 = vmul.f32 %v710, %v784
        %v849 = vmul.f32 %v712, %v785
        %v850 = vmul.f32 %v716, %v786
        %v851 = vmul.f32 %v718, %v787
        %v852 = vmul.f32 %v722, %v788
        %v853 = vmul.f32 %v724, %v789
        %v854 = vmul.f32 %v790, 0.044715
        %v855 = vmul.f32 %v791, 0.044715
        %v856 = vmul.f32 %v792, 0.044715
        %v857 = vmul.f32 %v793, 0.044715
        %v858 = vmul.f32 %v794, 0.044715
        %v859 = vmul.f32 %v795, 0.044715
        %v860 = vmul.f32 %v796, 0.044715
        %v861 = vmul.f32 %v797, 0.044715
        %v862 = vmul.f32 %v798, 0.044715
        %v863 = vmul.f32 %v799, 0.044715
        %v864 = vmul.f32 %v800, 0.044715
        %v865 = vmul.f32 %v801, 0.044715
        %v866 = vmul.f32 %v802, 0.044715
        %v867 = vmul.f32 %v803, 0.044715
        %v868 = vmul.f32 %v804, 0.044715
        %v869 = vmul.f32 %v805, 0.044715
        %v870 = vmul.f32 %v806, 0.044715
        %v871 = vmul.f32 %v807, 0.044715
        %v872 = vmul.f32 %v808, 0.044715
        %v873 = vmul.f32 %v809, 0.044715
        %v874 = vmul.f32 %v810, 0.044715
        %v875 = vmul.f32 %v811, 0.044715
        %v876 = vmul.f32 %v812, 0.044715
        %v877 = vmul.f32 %v813, 0.044715
        %v878 = vmul.f32 %v814, 0.044715
        %v879 = vmul.f32 %v815, 0.044715
        %v880 = vmul.f32 %v816, 0.044715
        %v881 = vmul.f32 %v817, 0.044715
        %v882 = vmul.f32 %v818, 0.044715
        %v883 = vmul.f32 %v819, 0.044715
        %v884 = vmul.f32 %v820, 0.044715
        %v885 = vmul.f32 %v821, 0.044715
        %v886 = vmul.f32 %v822, 0.044715
        %v887 = vmul.f32 %v823, 0.044715
        %v888 = vmul.f32 %v824, 0.044715
        %v889 = vmul.f32 %v825, 0.044715
        %v890 = vmul.f32 %v826, 0.044715
        %v891 = vmul.f32 %v827, 0.044715
        %v892 = vmul.f32 %v828, 0.044715
        %v893 = vmul.f32 %v829, 0.044715
        %v894 = vmul.f32 %v830, 0.044715
        %v895 = vmul.f32 %v831, 0.044715
        %v896 = vmul.f32 %v832, 0.044715
        %v897 = vmul.f32 %v833, 0.044715
        %v898 = vmul.f32 %v834, 0.044715
        %v899 = vmul.f32 %v835, 0.044715
        %v900 = vmul.f32 %v836, 0.044715
        %v901 = vmul.f32 %v837, 0.044715
        %v902 = vmul.f32 %v838, 0.044715
        %v903 = vmul.f32 %v839, 0.044715
        %v904 = vmul.f32 %v840, 0.044715
        %v905 = vmul.f32 %v841, 0.044715
        %v906 = vmul.f32 %v842, 0.044715
        %v907 = vmul.f32 %v843, 0.044715
        %v908 = vmul.f32 %v844, 0.044715
        %v909 = vmul.f32 %v845, 0.044715
        %v910 = vmul.f32 %v846, 0.044715
        %v911 = vmul.f32 %v847, 0.044715
        %v912 = vmul.f32 %v848, 0.044715
        %v913 = vmul.f32 %v849, 0.044715
        %v914 = vmul.f32 %v850, 0.044715
        %v915 = vmul.f32 %v851, 0.044715
        %v916 = vmul.f32 %v852, 0.044715
        %v917 = vmul.f32 %v853, 0.044715
        %v918 = vadd.f32 %v536, %v854
        %v919 = vadd.f32 %v538, %v855
        %v920 = vadd.f32 %v542, %v856
        %v921 = vadd.f32 %v544, %v857
        %v922 = vadd.f32 %v548, %v858
        %v923 = vadd.f32 %v550, %v859
        %v924 = vadd.f32 %v554, %v860
        %v925 = vadd.f32 %v556, %v861
        %v926 = vadd.f32 %v560, %v862
        %v927 = vadd.f32 %v562, %v863
        %v928 = vadd.f32 %v566, %v864
        %v929 = vadd.f32 %v568, %v865
        %v930 = vadd.f32 %v572, %v866
        %v931 = vadd.f32 %v574, %v867
        %v932 = vadd.f32 %v578, %v868
        %v933 = vadd.f32 %v580, %v869
        %v934 = vadd.f32 %v584, %v870
        %v935 = vadd.f32 %v586, %v871
        %v936 = vadd.f32 %v590, %v872
        %v937 = vadd.f32 %v592, %v873
        %v938 = vadd.f32 %v596, %v874
        %v939 = vadd.f32 %v598, %v875
        %v940 = vadd.f32 %v602, %v876
        %v941 = vadd.f32 %v604, %v877
        %v942 = vadd.f32 %v608, %v878
        %v943 = vadd.f32 %v610, %v879
        %v944 = vadd.f32 %v614, %v880
        %v945 = vadd.f32 %v616, %v881
        %v946 = vadd.f32 %v620, %v882
        %v947 = vadd.f32 %v622, %v883
        %v948 = vadd.f32 %v626, %v884
        %v949 = vadd.f32 %v628, %v885
        %v950 = vadd.f32 %v632, %v886
        %v951 = vadd.f32 %v634, %v887
        %v952 = vadd.f32 %v638, %v888
        %v953 = vadd.f32 %v640, %v889
        %v954 = vadd.f32 %v644, %v890
        %v955 = vadd.f32 %v646, %v891
        %v956 = vadd.f32 %v650, %v892
        %v957 = vadd.f32 %v652, %v893
        %v958 = vadd.f32 %v656, %v894
        %v959 = vadd.f32 %v658, %v895
        %v960 = vadd.f32 %v662, %v896
        %v961 = vadd.f32 %v664, %v897
        %v962 = vadd.f32 %v668, %v898
        %v963 = vadd.f32 %v670, %v899
        %v964 = vadd.f32 %v674, %v900
        %v965 = vadd.f32 %v676, %v901
        %v966 = vadd.f32 %v680, %v902
        %v967 = vadd.f32 %v682, %v903
        %v968 = vadd.f32 %v686, %v904
        %v969 = vadd.f32 %v688, %v905
        %v970 = vadd.f32 %v692, %v906
        %v971 = vadd.f32 %v694, %v907
        %v972 = vadd.f32 %v698, %v908
        %v973 = vadd.f32 %v700, %v909
        %v974 = vadd.f32 %v704, %v910
        %v975 = vadd.f32 %v706, %v911
        %v976 = vadd.f32 %v710, %v912
        %v977 = vadd.f32 %v712, %v913
        %v978 = vadd.f32 %v716, %v914
        %v979 = vadd.f32 %v718, %v915
        %v980 = vadd.f32 %v722, %v916
        %v981 = vadd.f32 %v724, %v917
        %v982 = vmul.f32 %v918, 0.7978846
        %v983 = vmul.f32 %v919, 0.7978846
        %v984 = vmul.f32 %v920, 0.7978846
        %v985 = vmul.f32 %v921, 0.7978846
        %v986 = vmul.f32 %v922, 0.7978846
        %v987 = vmul.f32 %v923, 0.7978846
        %v988 = vmul.f32 %v924, 0.7978846
        %v989 = vmul.f32 %v925, 0.7978846
        %v990 = vmul.f32 %v926, 0.7978846
        %v991 = vmul.f32 %v927, 0.7978846
        %v992 = vmul.f32 %v928, 0.7978846
        %v993 = vmul.f32 %v929, 0.7978846
        %v994 = vmul.f32 %v930, 0.7978846
        %v995 = vmul.f32 %v931, 0.7978846
        %v996 = vmul.f32 %v932, 0.7978846
        %v997 = vmul.f32 %v933, 0.7978846
        %v998 = vmul.f32 %v934, 0.7978846
        %v999 = vmul.f32 %v935, 0.7978846
        %v1000 = vmul.f32 %v936, 0.7978846
        %v1001 = vmul.f32 %v937, 0.7978846
        %v1002 = vmul.f32 %v938, 0.7978846
        %v1003 = vmul.f32 %v939, 0.7978846
        %v1004 = vmul.f32 %v940, 0.7978846
        %v1005 = vmul.f32 %v941, 0.7978846
        %v1006 = vmul.f32 %v942, 0.7978846
        %v1007 = vmul.f32 %v943, 0.7978846
        %v1008 = vmul.f32 %v944, 0.7978846
        %v1009 = vmul.f32 %v945, 0.7978846
        %v1010 = vmul.f32 %v946, 0.7978846
        %v1011 = vmul.f32 %v947, 0.7978846
        %v1012 = vmul.f32 %v948, 0.7978846
        %v1013 = vmul.f32 %v949, 0.7978846
        %v1014 = vmul.f32 %v950, 0.7978846
        %v1015 = vmul.f32 %v951, 0.7978846
        %v1016 = vmul.f32 %v952, 0.7978846
        %v1017 = vmul.f32 %v953, 0.7978846
        %v1018 = vmul.f32 %v954, 0.7978846
        %v1019 = vmul.f32 %v955, 0.7978846
        %v1020 = vmul.f32 %v956, 0.7978846
        %v1021 = vmul.f32 %v957, 0.7978846
        %v1022 = vmul.f32 %v958, 0.7978846
        %v1023 = vmul.f32 %v959, 0.7978846
        %v1024 = vmul.f32 %v960, 0.7978846
        %v1025 = vmul.f32 %v961, 0.7978846
        %v1026 = vmul.f32 %v962, 0.7978846
        %v1027 = vmul.f32 %v963, 0.7978846
        %v1028 = vmul.f32 %v964, 0.7978846
        %v1029 = vmul.f32 %v965, 0.7978846
        %v1030 = vmul.f32 %v966, 0.7978846
        %v1031 = vmul.f32 %v967, 0.7978846
        %v1032 = vmul.f32 %v968, 0.7978846
        %v1033 = vmul.f32 %v969, 0.7978846
        %v1034 = vmul.f32 %v970, 0.7978846
        %v1035 = vmul.f32 %v971, 0.7978846
        %v1036 = vmul.f32 %v972, 0.7978846
        %v1037 = vmul.f32 %v973, 0.7978846
        %v1038 = vmul.f32 %v974, 0.7978846
        %v1039 = vmul.f32 %v975, 0.7978846
        %v1040 = vmul.f32 %v976, 0.7978846
        %v1041 = vmul.f32 %v977, 0.7978846
        %v1042 = vmul.f32 %v978, 0.7978846
        %v1043 = vmul.f32 %v979, 0.7978846
        %v1044 = vmul.f32 %v980, 0.7978846
        %v1045 = vmul.f32 %v981, 0.7978846
        %v1046 = vtanh.pop %v982
        %v1047 = vtanh.pop %v983
        %v1048 = vtanh.pop %v984
        %v1049 = vtanh.pop %v985
        %v1050 = vtanh.pop %v986
        %v1051 = vtanh.pop %v987
        %v1052 = vtanh.pop %v988
        %v1053 = vtanh.pop %v989
        %v1054 = vtanh.pop %v990
        %v1055 = vtanh.pop %v991
        %v1056 = vtanh.pop %v992
        %v1057 = vtanh.pop %v993
        %v1058 = vtanh.pop %v994
        %v1059 = vtanh.pop %v995
        %v1060 = vtanh.pop %v996
        %v1061 = vtanh.pop %v997
        %v1062 = vtanh.pop %v998
        %v1063 = vtanh.pop %v999
        %v1064 = vtanh.pop %v1000
        %v1065 = vtanh.pop %v1001
        %v1066 = vtanh.pop %v1002
        %v1067 = vtanh.pop %v1003
        %v1068 = vtanh.pop %v1004
        %v1069 = vtanh.pop %v1005
        %v1070 = vtanh.pop %v1006
        %v1071 = vtanh.pop %v1007
        %v1072 = vtanh.pop %v1008
        %v1073 = vtanh.pop %v1009
        %v1074 = vtanh.pop %v1010
        %v1075 = vtanh.pop %v1011
        %v1076 = vtanh.pop %v1012
        %v1077 = vtanh.pop %v1013
        %v1078 = vtanh.pop %v1014
        %v1079 = vtanh.pop %v1015
        %v1080 = vtanh.pop %v1016
        %v1081 = vtanh.pop %v1017
        %v1082 = vtanh.pop %v1018
        %v1083 = vtanh.pop %v1019
        %v1084 = vtanh.pop %v1020
        %v1085 = vtanh.pop %v1021
        %v1086 = vtanh.pop %v1022
        %v1087 = vtanh.pop %v1023
        %v1088 = vtanh.pop %v1024
        %v1089 = vtanh.pop %v1025
        %v1090 = vtanh.pop %v1026
        %v1091 = vtanh.pop %v1027
        %v1092 = vtanh.pop %v1028
        %v1093 = vtanh.pop %v1029
        %v1094 = vtanh.pop %v1030
        %v1095 = vtanh.pop %v1031
        %v1096 = vtanh.pop %v1032
        %v1097 = vtanh.pop %v1033
        %v1098 = vtanh.pop %v1034
        %v1099 = vtanh.pop %v1035
        %v1100 = vtanh.pop %v1036
        %v1101 = vtanh.pop %v1037
        %v1102 = vtanh.pop %v1038
        %v1103 = vtanh.pop %v1039
        %v1104 = vtanh.pop %v1040
        %v1105 = vtanh.pop %v1041
        %v1106 = vtanh.pop %v1042
        %v1107 = vtanh.pop %v1043
        %v1108 = vtanh.pop %v1044
        %v1109 = vtanh.pop %v1045
        %v1110 = vadd.f32 %v1046, 1.0
        %v1111 = vadd.f32 %v1047, 1.0
        %v1112 = vadd.f32 %v1048, 1.0
        %v1113 = vadd.f32 %v1049, 1.0
        %v1114 = vadd.f32 %v1050, 1.0
        %v1115 = vadd.f32 %v1051, 1.0
        %v1116 = vadd.f32 %v1052, 1.0
        %v1117 = vadd.f32 %v1053, 1.0
        %v1118 = vadd.f32 %v1054, 1.0
        %v1119 = vadd.f32 %v1055, 1.0
        %v1120 = vadd.f32 %v1056, 1.0
        %v1121 = vadd.f32 %v1057, 1.0
        %v1122 = vadd.f32 %v1058, 1.0
        %v1123 = vadd.f32 %v1059, 1.0
        %v1124 = vadd.f32 %v1060, 1.0
        %v1125 = vadd.f32 %v1061, 1.0
        %v1126 = vadd.f32 %v1062, 1.0
        %v1127 = vadd.f32 %v1063, 1.0
        %v1128 = vadd.f32 %v1064, 1.0
        %v1129 = vadd.f32 %v1065, 1.0
        %v1130 = vadd.f32 %v1066, 1.0
        %v1131 = vadd.f32 %v1067, 1.0
        %v1132 = vadd.f32 %v1068, 1.0
        %v1133 = vadd.f32 %v1069, 1.0
        %v1134 = vadd.f32 %v1070, 1.0
        %v1135 = vadd.f32 %v1071, 1.0
        %v1136 = vadd.f32 %v1072, 1.0
        %v1137 = vadd.f32 %v1073, 1.0
        %v1138 = vadd.f32 %v1074, 1.0
        %v1139 = vadd.f32 %v1075, 1.0
        %v1140 = vadd.f32 %v1076, 1.0
        %v1141 = vadd.f32 %v1077, 1.0
        %v1142 = vadd.f32 %v1078, 1.0
        %v1143 = vadd.f32 %v1079, 1.0
        %v1144 = vadd.f32 %v1080, 1.0
        %v1145 = vadd.f32 %v1081, 1.0
        %v1146 = vadd.f32 %v1082, 1.0
        %v1147 = vadd.f32 %v1083, 1.0
        %v1148 = vadd.f32 %v1084, 1.0
        %v1149 = vadd.f32 %v1085, 1.0
        %v1150 = vadd.f32 %v1086, 1.0
        %v1151 = vadd.f32 %v1087, 1.0
        %v1152 = vadd.f32 %v1088, 1.0
        %v1153 = vadd.f32 %v1089, 1.0
        %v1154 = vadd.f32 %v1090, 1.0
        %v1155 = vadd.f32 %v1091, 1.0
        %v1156 = vadd.f32 %v1092, 1.0
        %v1157 = vadd.f32 %v1093, 1.0
        %v1158 = vadd.f32 %v1094, 1.0
        %v1159 = vadd.f32 %v1095, 1.0
        %v1160 = vadd.f32 %v1096, 1.0
        %v1161 = vadd.f32 %v1097, 1.0
        %v1162 = vadd.f32 %v1098, 1.0
        %v1163 = vadd.f32 %v1099, 1.0
        %v1164 = vadd.f32 %v1100, 1.0
        %v1165 = vadd.f32 %v1101, 1.0
        %v1166 = vadd.f32 %v1102, 1.0
        %v1167 = vadd.f32 %v1103, 1.0
        %v1168 = vadd.f32 %v1104, 1.0
        %v1169 = vadd.f32 %v1105, 1.0
        %v1170 = vadd.f32 %v1106, 1.0
        %v1171 = vadd.f32 %v1107, 1.0
        %v1172 = vadd.f32 %v1108, 1.0
        %v1173 = vadd.f32 %v1109, 1.0
        %v1174 = vmul.f32 %v1110, 0.5
        %v1175 = vmul.f32 %v1111, 0.5
        %v1176 = vmul.f32 %v1112, 0.5
        %v1177 = vmul.f32 %v1113, 0.5
        %v1178 = vmul.f32 %v1114, 0.5
        %v1179 = vmul.f32 %v1115, 0.5
        %v1180 = vmul.f32 %v1116, 0.5
        %v1181 = vmul.f32 %v1117, 0.5
        %v1182 = vmul.f32 %v1118, 0.5
        %v1183 = vmul.f32 %v1119, 0.5
        %v1184 = vmul.f32 %v1120, 0.5
        %v1185 = vmul.f32 %v1121, 0.5
        %v1186 = vmul.f32 %v1122, 0.5
        %v1187 = vmul.f32 %v1123, 0.5
        %v1188 = vmul.f32 %v1124, 0.5
        %v1189 = vmul.f32 %v1125, 0.5
        %v1190 = vmul.f32 %v1126, 0.5
        %v1191 = vmul.f32 %v1127, 0.5
        %v1192 = vmul.f32 %v1128, 0.5
        %v1193 = vmul.f32 %v1129, 0.5
        %v1194 = vmul.f32 %v1130, 0.5
        %v1195 = vmul.f32 %v1131, 0.5
        %v1196 = vmul.f32 %v1132, 0.5
        %v1197 = vmul.f32 %v1133, 0.5
        %v1198 = vmul.f32 %v1134, 0.5
        %v1199 = vmul.f32 %v1135, 0.5
        %v1200 = vmul.f32 %v1136, 0.5
        %v1201 = vmul.f32 %v1137, 0.5
        %v1202 = vmul.f32 %v1138, 0.5
        %v1203 = vmul.f32 %v1139, 0.5
        %v1204 = vmul.f32 %v1140, 0.5
        %v1205 = vmul.f32 %v1141, 0.5
        %v1206 = vmul.f32 %v1142, 0.5
        %v1207 = vmul.f32 %v1143, 0.5
        %v1208 = vmul.f32 %v1144, 0.5
        %v1209 = vmul.f32 %v1145, 0.5
        %v1210 = vmul.f32 %v1146, 0.5
        %v1211 = vmul.f32 %v1147, 0.5
        %v1212 = vmul.f32 %v1148, 0.5
        %v1213 = vmul.f32 %v1149, 0.5
        %v1214 = vmul.f32 %v1150, 0.5
        %v1215 = vmul.f32 %v1151, 0.5
        %v1216 = vmul.f32 %v1152, 0.5
        %v1217 = vmul.f32 %v1153, 0.5
        %v1218 = vmul.f32 %v1154, 0.5
        %v1219 = vmul.f32 %v1155, 0.5
        %v1220 = vmul.f32 %v1156, 0.5
        %v1221 = vmul.f32 %v1157, 0.5
        %v1222 = vmul.f32 %v1158, 0.5
        %v1223 = vmul.f32 %v1159, 0.5
        %v1224 = vmul.f32 %v1160, 0.5
        %v1225 = vmul.f32 %v1161, 0.5
        %v1226 = vmul.f32 %v1162, 0.5
        %v1227 = vmul.f32 %v1163, 0.5
        %v1228 = vmul.f32 %v1164, 0.5
        %v1229 = vmul.f32 %v1165, 0.5
        %v1230 = vmul.f32 %v1166, 0.5
        %v1231 = vmul.f32 %v1167, 0.5
        %v1232 = vmul.f32 %v1168, 0.5
        %v1233 = vmul.f32 %v1169, 0.5
        %v1234 = vmul.f32 %v1170, 0.5
        %v1235 = vmul.f32 %v1171, 0.5
        %v1236 = vmul.f32 %v1172, 0.5
        %v1237 = vmul.f32 %v1173, 0.5
        %v1238 = vmul.f32 %v536, %v1174
        %v1239 = vmul.f32 %v538, %v1175
        %v1240 = vmul.f32 %v542, %v1176
        %v1241 = vmul.f32 %v544, %v1177
        %v1242 = vmul.f32 %v548, %v1178
        %v1243 = vmul.f32 %v550, %v1179
        %v1244 = vmul.f32 %v554, %v1180
        %v1245 = vmul.f32 %v556, %v1181
        %v1246 = vmul.f32 %v560, %v1182
        %v1247 = vmul.f32 %v562, %v1183
        %v1248 = vmul.f32 %v566, %v1184
        %v1249 = vmul.f32 %v568, %v1185
        %v1250 = vmul.f32 %v572, %v1186
        %v1251 = vmul.f32 %v574, %v1187
        %v1252 = vmul.f32 %v578, %v1188
        %v1253 = vmul.f32 %v580, %v1189
        %v1254 = vmul.f32 %v584, %v1190
        %v1255 = vmul.f32 %v586, %v1191
        %v1256 = vmul.f32 %v590, %v1192
        %v1257 = vmul.f32 %v592, %v1193
        %v1258 = vmul.f32 %v596, %v1194
        %v1259 = vmul.f32 %v598, %v1195
        %v1260 = vmul.f32 %v602, %v1196
        %v1261 = vmul.f32 %v604, %v1197
        %v1262 = vmul.f32 %v608, %v1198
        %v1263 = vmul.f32 %v610, %v1199
        %v1264 = vmul.f32 %v614, %v1200
        %v1265 = vmul.f32 %v616, %v1201
        %v1266 = vmul.f32 %v620, %v1202
        %v1267 = vmul.f32 %v622, %v1203
        %v1268 = vmul.f32 %v626, %v1204
        %v1269 = vmul.f32 %v628, %v1205
        %v1270 = vmul.f32 %v632, %v1206
        %v1271 = vmul.f32 %v634, %v1207
        %v1272 = vmul.f32 %v638, %v1208
        %v1273 = vmul.f32 %v640, %v1209
        %v1274 = vmul.f32 %v644, %v1210
        %v1275 = vmul.f32 %v646, %v1211
        %v1276 = vmul.f32 %v650, %v1212
        %v1277 = vmul.f32 %v652, %v1213
        %v1278 = vmul.f32 %v656, %v1214
        %v1279 = vmul.f32 %v658, %v1215
        %v1280 = vmul.f32 %v662, %v1216
        %v1281 = vmul.f32 %v664, %v1217
        %v1282 = vmul.f32 %v668, %v1218
        %v1283 = vmul.f32 %v670, %v1219
        %v1284 = vmul.f32 %v674, %v1220
        %v1285 = vmul.f32 %v676, %v1221
        %v1286 = vmul.f32 %v680, %v1222
        %v1287 = vmul.f32 %v682, %v1223
        %v1288 = vmul.f32 %v686, %v1224
        %v1289 = vmul.f32 %v688, %v1225
        %v1290 = vmul.f32 %v692, %v1226
        %v1291 = vmul.f32 %v694, %v1227
        %v1292 = vmul.f32 %v698, %v1228
        %v1293 = vmul.f32 %v700, %v1229
        %v1294 = vmul.f32 %v704, %v1230
        %v1295 = vmul.f32 %v706, %v1231
        %v1296 = vmul.f32 %v710, %v1232
        %v1297 = vmul.f32 %v712, %v1233
        %v1298 = vmul.f32 %v716, %v1234
        %v1299 = vmul.f32 %v718, %v1235
        %v1300 = vmul.f32 %v722, %v1236
        %v1301 = vmul.f32 %v724, %v1237
        %v1302 = vld [vmem:[#allocation7] sm:$0xff]
        %v1303 = vld [vmem:[#allocation7 + $0x8] sm:$0xff]
        %v1304 = vld [vmem:[#allocation7 + $0x10] sm:$0xff]
        %v1305 = vld [vmem:[#allocation7 + $0x18] sm:$0xff]
        %v1306 = vld [vmem:[#allocation7 + $0x20] sm:$0xff]
        %v1307 = vld [vmem:[#allocation7 + $0x28] sm:$0xff]
        %v1308 = vld [vmem:[#allocation7 + $0x30] sm:$0xff]
        %v1309 = vld [vmem:[#allocation7 + $0x38] sm:$0xff]
        %v1310 = vld [vmem:[#allocation7 + $0x40] sm:$0xff]
        %v1311 = vld [vmem:[#allocation7 + $0x48] sm:$0xff]
        %v1312 = vld [vmem:[#allocation7 + $0x50] sm:$0xff]
        %v1313 = vld [vmem:[#allocation7 + $0x58] sm:$0xff]
        %v1314 = vld [vmem:[#allocation7 + $0x60] sm:$0xff]
        %v1315 = vld [vmem:[#allocation7 + $0x68] sm:$0xff]
        %v1316 = vld [vmem:[#allocation7 + $0x70] sm:$0xff]
        %v1317 = vld [vmem:[#allocation7 + $0x78] sm:$0xff]
        %v1318 = vld [vmem:[#allocation7 + $0x80] sm:$0xff]
        %v1319 = vld [vmem:[#allocation7 + $0x88] sm:$0xff]
        %v1320 = vld [vmem:[#allocation7 + $0x90] sm:$0xff]
        %v1321 = vld [vmem:[#allocation7 + $0x98] sm:$0xff]
        %v1322 = vld [vmem:[#allocation7 + $0xa0] sm:$0xff]
        %v1323 = vld [vmem:[#allocation7 + $0xa8] sm:$0xff]
        %v1324 = vld [vmem:[#allocation7 + $0xb0] sm:$0xff]
        %v1325 = vld [vmem:[#allocation7 + $0xb8] sm:$0xff]
        %v1326 = vld [vmem:[#allocation7 + $0xc0] sm:$0xff]
        %v1327 = vld [vmem:[#allocation7 + $0xc8] sm:$0xff]
        %v1328 = vld [vmem:[#allocation7 + $0xd0] sm:$0xff]
        %v1329 = vld [vmem:[#allocation7 + $0xd8] sm:$0xff]
        %v1330 = vld [vmem:[#allocation7 + $0xe0] sm:$0xff]
        %v1331 = vld [vmem:[#allocation7 + $0xe8] sm:$0xff]
        %v1332 = vld [vmem:[#allocation7 + $0xf0] sm:$0xff]
        %v1333 = vld [vmem:[#allocation7 + $0xf8] sm:$0xff]
        %v1334 = vld [vmem:[#allocation7 + $0x100] sm:$0xff]
        %v1335 = vld [vmem:[#allocation7 + $0x108] sm:$0xff]
        %v1336 = vld [vmem:[#allocation7 + $0x110] sm:$0xff]
        %v1337 = vld [vmem:[#allocation7 + $0x118] sm:$0xff]
        %v1338 = vld [vmem:[#allocation7 + $0x120] sm:$0xff]
        %v1339 = vld [vmem:[#allocation7 + $0x128] sm:$0xff]
        %v1340 = vld [vmem:[#allocation7 + $0x130] sm:$0xff]
        %v1341 = vld [vmem:[#allocation7 + $0x138] sm:$0xff]
        %v1342 = vld [vmem:[#allocation7 + $0x140] sm:$0xff]
        %v1343 = vld [vmem:[#allocation7 + $0x148] sm:$0xff]
        %v1344 = vld [vmem:[#allocation7 + $0x150] sm:$0xff]
        %v1345 = vld [vmem:[#allocation7 + $0x158] sm:$0xff]
        %v1346 = vld [vmem:[#allocation7 + $0x160] sm:$0xff]
        %v1347 = vld [vmem:[#allocation7 + $0x168] sm:$0xff]
        %v1348 = vld [vmem:[#allocation7 + $0x170] sm:$0xff]
        %v1349 = vld [vmem:[#allocation7 + $0x178] sm:$0xff]
        %v1350 = vld [vmem:[#allocation7 + $0x180] sm:$0xff]
        %v1351 = vld [vmem:[#allocation7 + $0x188] sm:$0xff]
        %v1352 = vld [vmem:[#allocation7 + $0x190] sm:$0xff]
        %v1353 = vld [vmem:[#allocation7 + $0x198] sm:$0xff]
        %v1354 = vld [vmem:[#allocation7 + $0x1a0] sm:$0xff]
        %v1355 = vld [vmem:[#allocation7 + $0x1a8] sm:$0xff]
        %v1356 = vld [vmem:[#allocation7 + $0x1b0] sm:$0xff]
        %v1357 = vld [vmem:[#allocation7 + $0x1b8] sm:$0xff]
        %v1358 = vld [vmem:[#allocation7 + $0x1c0] sm:$0xff]
        %v1359 = vld [vmem:[#allocation7 + $0x1c8] sm:$0xff]
        %v1360 = vld [vmem:[#allocation7 + $0x1d0] sm:$0xff]
        %v1361 = vld [vmem:[#allocation7 + $0x1d8] sm:$0xff]
        %v1362 = vld [vmem:[#allocation7 + $0x1e0] sm:$0xff]
        %v1363 = vld [vmem:[#allocation7 + $0x1e8] sm:$0xff]
        %v1364 = vld [vmem:[#allocation7 + $0x1f0] sm:$0xff]
        %v1365 = vld [vmem:[#allocation7 + $0x1f8] sm:$0xff]
        %v1366 = vld [vmem:[%s4] sm:$0x3]
        %v1368 = vlaneseq
        %v1369 = vshrl.u32 %v1368, 7
        %v1370 = vsub.s32 0, %v1369
        %v1371 = vrot.slane %v1366, %v1370
        %v1372 = vlaneseq
        %v1373 = vshrl.u32 %v1372, 7
        %v1374 = vsub.s32 1, %v1373
        %v1375 = vrot.slane %v1366, %v1374
        %1378 = vmatprep.subr.mxu0 %v1333
        %1379 = vmatpush1.msra.mxu0 %v1332
        %1380 = vmatprep.subr.mxu0 %v1331
        %1381 = vmatpush1.msra.mxu0 %v1330
        %1382 = vmatprep.subr.mxu0 %v1329
        %1383 = vmatpush1.msra.mxu0 %v1328
        %1384 = vmatprep.subr.mxu0 %v1327
        %1385 = vmatpush1.msra.mxu0 %v1326
        %1386 = vmatprep.subr.mxu0 %v1325
        %1387 = vmatpush1.msra.mxu0 %v1324
        %1388 = vmatprep.subr.mxu0 %v1323
        %1389 = vmatpush1.msra.mxu0 %v1322
        %1390 = vmatprep.subr.mxu0 %v1321
        %1391 = vmatpush1.msra.mxu0 %v1320
        %1392 = vmatprep.subr.mxu0 %v1319
        %1393 = vmatpush1.msra.mxu0 %v1318
        %1394 = vmatprep.subr.mxu0 %v1317
        %1395 = vmatpush1.msra.mxu0 %v1316
        %1396 = vmatprep.subr.mxu0 %v1315
        %1397 = vmatpush1.msra.mxu0 %v1314
        %1398 = vmatprep.subr.mxu0 %v1313
        %1399 = vmatpush1.msra.mxu0 %v1312
        %1400 = vmatprep.subr.mxu0 %v1311
        %1401 = vmatpush1.msra.mxu0 %v1310
        %1402 = vmatprep.subr.mxu0 %v1309
        %1403 = vmatpush1.msra.mxu0 %v1308
        %1404 = vmatprep.subr.mxu0 %v1307
        %1405 = vmatpush1.msra.mxu0 %v1306
        %1406 = vmatprep.subr.mxu0 %v1305
        %1407 = vmatpush1.msra.mxu0 %v1304
        %1408 = vmatprep.subr.mxu0 %v1303
        %1409 = vmatpush1.msra.mxu0 %v1302
        %1410 = vmatprep.subr.mxu0 %v1365
        %1411 = vmatpush2.msra.mxu0 %v1364
        %1412 = vmatprep.subr.mxu0 %v1363
        %1413 = vmatpush2.msra.mxu0 %v1362
        %1414 = vmatprep.subr.mxu0 %v1361
        %1415 = vmatpush2.msra.mxu0 %v1360
        %1416 = vmatprep.subr.mxu0 %v1359
        %1417 = vmatpush2.msra.mxu0 %v1358
        %1418 = vmatprep.subr.mxu0 %v1357
        %1419 = vmatpush2.msra.mxu0 %v1356
        %1420 = vmatprep.subr.mxu0 %v1355
        %1421 = vmatpush2.msra.mxu0 %v1354
        %1422 = vmatprep.subr.mxu0 %v1353
        %1423 = vmatpush2.msra.mxu0 %v1352
        %1424 = vmatprep.subr.mxu0 %v1351
        %1425 = vmatpush2.msra.mxu0 %v1350
        %1426 = vmatprep.subr.mxu0 %v1349
        %1427 = vmatpush2.msra.mxu0 %v1348
        %1428 = vmatprep.subr.mxu0 %v1347
        %1429 = vmatpush2.msra.mxu0 %v1346
        %1430 = vmatprep.subr.mxu0 %v1345
        %1431 = vmatpush2.msra.mxu0 %v1344
        %1432 = vmatprep.subr.mxu0 %v1343
        %1433 = vmatpush2.msra.mxu0 %v1342
        %1434 = vmatprep.subr.mxu0 %v1341
        %1435 = vmatpush2.msra.mxu0 %v1340
        %1436 = vmatprep.subr.mxu0 %v1339
        %1437 = vmatpush2.msra.mxu0 %v1338
        %1438 = vmatprep.subr.mxu0 %v1337
        %1439 = vmatpush2.msra.mxu0 %v1336
        %1440 = vmatprep.subr.mxu0 %v1335
        %1441 = vmatpush2.msra.mxu0 %v1334
        %1442 = vmatprep.mubr.f32.mxu0 %v1239
        %1443 = vmatmul.mubr.f32.gmra.mxu0 %v1238
        %v1444 = vpop.f32.mrf.mxu0
        %v1445 = vadd.f32 %v1371, %v1444
        %v1446 = vpop.f32.mrf.mxu0
        %v1447 = vadd.f32 %v1375, %v1446
        %1448 = vmatprep.mubr.f32.mxu0 %v1241
        %1449 = vmatmul.mubr.f32.gmra.mxu0 %v1240
        %v1450 = vpop.f32.mrf.mxu0
        %v1451 = vadd.f32 %v1371, %v1450
        %v1452 = vpop.f32.mrf.mxu0
        %v1453 = vadd.f32 %v1375, %v1452
        %1454 = vmatprep.mubr.f32.mxu0 %v1243
        %1455 = vmatmul.mubr.f32.gmra.mxu0 %v1242
        %v1456 = vpop.f32.mrf.mxu0
        %v1457 = vadd.f32 %v1371, %v1456
        %v1458 = vpop.f32.mrf.mxu0
        %v1459 = vadd.f32 %v1375, %v1458
        %1460 = vmatprep.mubr.f32.mxu0 %v1245
        %1461 = vmatmul.mubr.f32.gmra.mxu0 %v1244
        %v1462 = vpop.f32.mrf.mxu0
        %v1463 = vadd.f32 %v1371, %v1462
        %v1464 = vpop.f32.mrf.mxu0
        %v1465 = vadd.f32 %v1375, %v1464
        %1466 = vmatprep.mubr.f32.mxu0 %v1247
        %1467 = vmatmul.mubr.f32.gmra.mxu0 %v1246
        %v1468 = vpop.f32.mrf.mxu0
        %v1469 = vadd.f32 %v1371, %v1468
        %v1470 = vpop.f32.mrf.mxu0
        %v1471 = vadd.f32 %v1375, %v1470
        %1472 = vmatprep.mubr.f32.mxu0 %v1249
        %1473 = vmatmul.mubr.f32.gmra.mxu0 %v1248
        %v1474 = vpop.f32.mrf.mxu0
        %v1475 = vadd.f32 %v1371, %v1474
        %v1476 = vpop.f32.mrf.mxu0
        %v1477 = vadd.f32 %v1375, %v1476
        %1478 = vmatprep.mubr.f32.mxu0 %v1251
        %1479 = vmatmul.mubr.f32.gmra.mxu0 %v1250
        %v1480 = vpop.f32.mrf.mxu0
        %v1481 = vadd.f32 %v1371, %v1480
        %v1482 = vpop.f32.mrf.mxu0
        %v1483 = vadd.f32 %v1375, %v1482
        %1484 = vmatprep.mubr.f32.mxu0 %v1253
        %1485 = vmatmul.mubr.f32.gmra.mxu0 %v1252
        %v1486 = vpop.f32.mrf.mxu0
        %v1487 = vadd.f32 %v1371, %v1486
        %v1488 = vpop.f32.mrf.mxu0
        %v1489 = vadd.f32 %v1375, %v1488
        %1490 = vmatprep.mubr.f32.mxu0 %v1255
        %1491 = vmatmul.mubr.f32.gmra.mxu0 %v1254
        %v1492 = vpop.f32.mrf.mxu0
        %v1493 = vadd.f32 %v1371, %v1492
        %v1494 = vpop.f32.mrf.mxu0
        %v1495 = vadd.f32 %v1375, %v1494
        %1496 = vmatprep.mubr.f32.mxu0 %v1257
        %1497 = vmatmul.mubr.f32.gmra.mxu0 %v1256
        %v1498 = vpop.f32.mrf.mxu0
        %v1499 = vadd.f32 %v1371, %v1498
        %v1500 = vpop.f32.mrf.mxu0
        %v1501 = vadd.f32 %v1375, %v1500
        %1502 = vmatprep.mubr.f32.mxu0 %v1259
        %1503 = vmatmul.mubr.f32.gmra.mxu0 %v1258
        %v1504 = vpop.f32.mrf.mxu0
        %v1505 = vadd.f32 %v1371, %v1504
        %v1506 = vpop.f32.mrf.mxu0
        %v1507 = vadd.f32 %v1375, %v1506
        %1508 = vmatprep.mubr.f32.mxu0 %v1261
        %1509 = vmatmul.mubr.f32.gmra.mxu0 %v1260
        %v1510 = vpop.f32.mrf.mxu0
        %v1511 = vadd.f32 %v1371, %v1510
        %v1512 = vpop.f32.mrf.mxu0
        %v1513 = vadd.f32 %v1375, %v1512
        %1514 = vmatprep.mubr.f32.mxu0 %v1263
        %1515 = vmatmul.mubr.f32.gmra.mxu0 %v1262
        %v1516 = vpop.f32.mrf.mxu0
        %v1517 = vadd.f32 %v1371, %v1516
        %v1518 = vpop.f32.mrf.mxu0
        %v1519 = vadd.f32 %v1375, %v1518
        %1520 = vmatprep.mubr.f32.mxu0 %v1265
        %1521 = vmatmul.mubr.f32.gmra.mxu0 %v1264
        %v1522 = vpop.f32.mrf.mxu0
        %v1523 = vadd.f32 %v1371, %v1522
        %v1524 = vpop.f32.mrf.mxu0
        %v1525 = vadd.f32 %v1375, %v1524
        %1526 = vmatprep.mubr.f32.mxu0 %v1267
        %1527 = vmatmul.mubr.f32.gmra.mxu0 %v1266
        %v1528 = vpop.f32.mrf.mxu0
        %v1529 = vadd.f32 %v1371, %v1528
        %v1530 = vpop.f32.mrf.mxu0
        %v1531 = vadd.f32 %v1375, %v1530
        %1532 = vmatprep.mubr.f32.mxu0 %v1269
        %1533 = vmatmul.mubr.f32.gmra.mxu0 %v1268
        %v1534 = vpop.f32.mrf.mxu0
        %v1535 = vadd.f32 %v1371, %v1534
        %v1536 = vpop.f32.mrf.mxu0
        %v1537 = vadd.f32 %v1375, %v1536
        %1538 = vmatprep.mubr.f32.mxu0 %v1271
        %1539 = vmatmul.mubr.f32.gmra.mxu0 %v1270
        %v1540 = vpop.f32.mrf.mxu0
        %v1541 = vadd.f32 %v1371, %v1540
        %v1542 = vpop.f32.mrf.mxu0
        %v1543 = vadd.f32 %v1375, %v1542
        %1544 = vmatprep.mubr.f32.mxu0 %v1273
        %1545 = vmatmul.mubr.f32.gmra.mxu0 %v1272
        %v1546 = vpop.f32.mrf.mxu0
        %v1547 = vadd.f32 %v1371, %v1546
        %v1548 = vpop.f32.mrf.mxu0
        %v1549 = vadd.f32 %v1375, %v1548
        %1550 = vmatprep.mubr.f32.mxu0 %v1275
        %1551 = vmatmul.mubr.f32.gmra.mxu0 %v1274
        %v1552 = vpop.f32.mrf.mxu0
        %v1553 = vadd.f32 %v1371, %v1552
        %v1554 = vpop.f32.mrf.mxu0
        %v1555 = vadd.f32 %v1375, %v1554
        %1556 = vmatprep.mubr.f32.mxu0 %v1277
        %1557 = vmatmul.mubr.f32.gmra.mxu0 %v1276
        %v1558 = vpop.f32.mrf.mxu0
        %v1559 = vadd.f32 %v1371, %v1558
        %v1560 = vpop.f32.mrf.mxu0
        %v1561 = vadd.f32 %v1375, %v1560
        %1562 = vmatprep.mubr.f32.mxu0 %v1279
        %1563 = vmatmul.mubr.f32.gmra.mxu0 %v1278
        %v1564 = vpop.f32.mrf.mxu0
        %v1565 = vadd.f32 %v1371, %v1564
        %v1566 = vpop.f32.mrf.mxu0
        %v1567 = vadd.f32 %v1375, %v1566
        %1568 = vmatprep.mubr.f32.mxu0 %v1281
        %1569 = vmatmul.mubr.f32.gmra.mxu0 %v1280
        %v1570 = vpop.f32.mrf.mxu0
        %v1571 = vadd.f32 %v1371, %v1570
        %v1572 = vpop.f32.mrf.mxu0
        %v1573 = vadd.f32 %v1375, %v1572
        %1574 = vmatprep.mubr.f32.mxu0 %v1283
        %1575 = vmatmul.mubr.f32.gmra.mxu0 %v1282
        %v1576 = vpop.f32.mrf.mxu0
        %v1577 = vadd.f32 %v1371, %v1576
        %v1578 = vpop.f32.mrf.mxu0
        %v1579 = vadd.f32 %v1375, %v1578
        %1580 = vmatprep.mubr.f32.mxu0 %v1285
        %1581 = vmatmul.mubr.f32.gmra.mxu0 %v1284
        %v1582 = vpop.f32.mrf.mxu0
        %v1583 = vadd.f32 %v1371, %v1582
        %v1584 = vpop.f32.mrf.mxu0
        %v1585 = vadd.f32 %v1375, %v1584
        %1586 = vmatprep.mubr.f32.mxu0 %v1287
        %1587 = vmatmul.mubr.f32.gmra.mxu0 %v1286
        %v1588 = vpop.f32.mrf.mxu0
        %v1589 = vadd.f32 %v1371, %v1588
        %v1590 = vpop.f32.mrf.mxu0
        %v1591 = vadd.f32 %v1375, %v1590
        %1592 = vmatprep.mubr.f32.mxu0 %v1289
        %1593 = vmatmul.mubr.f32.gmra.mxu0 %v1288
        %v1594 = vpop.f32.mrf.mxu0
        %v1595 = vadd.f32 %v1371, %v1594
        %v1596 = vpop.f32.mrf.mxu0
        %v1597 = vadd.f32 %v1375, %v1596
        %1598 = vmatprep.mubr.f32.mxu0 %v1291
        %1599 = vmatmul.mubr.f32.gmra.mxu0 %v1290
        %v1600 = vpop.f32.mrf.mxu0
        %v1601 = vadd.f32 %v1371, %v1600
        %v1602 = vpop.f32.mrf.mxu0
        %v1603 = vadd.f32 %v1375, %v1602
        %1604 = vmatprep.mubr.f32.mxu0 %v1293
        %1605 = vmatmul.mubr.f32.gmra.mxu0 %v1292
        %v1606 = vpop.f32.mrf.mxu0
        %v1607 = vadd.f32 %v1371, %v1606
        %v1608 = vpop.f32.mrf.mxu0
        %v1609 = vadd.f32 %v1375, %v1608
        %1610 = vmatprep.mubr.f32.mxu0 %v1295
        %1611 = vmatmul.mubr.f32.gmra.mxu0 %v1294
        %v1612 = vpop.f32.mrf.mxu0
        %v1613 = vadd.f32 %v1371, %v1612
        %v1614 = vpop.f32.mrf.mxu0
        %v1615 = vadd.f32 %v1375, %v1614
        %1616 = vmatprep.mubr.f32.mxu0 %v1297
        %1617 = vmatmul.mubr.f32.gmra.mxu0 %v1296
        %v1618 = vpop.f32.mrf.mxu0
        %v1619 = vadd.f32 %v1371, %v1618
        %v1620 = vpop.f32.mrf.mxu0
        %v1621 = vadd.f32 %v1375, %v1620
        %1622 = vmatprep.mubr.f32.mxu0 %v1299
        %1623 = vmatmul.mubr.f32.gmra.mxu0 %v1298
        %v1624 = vpop.f32.mrf.mxu0
        %v1625 = vadd.f32 %v1371, %v1624
        %v1626 = vpop.f32.mrf.mxu0
        %v1627 = vadd.f32 %v1375, %v1626
        %1628 = vmatprep.mubr.f32.mxu0 %v1301
        %1629 = vmatmul.mubr.f32.gmra.mxu0 %v1300
        %v1630 = vpop.f32.mrf.mxu0
        %v1631 = vadd.f32 %v1371, %v1630
        %v1632 = vpop.f32.mrf.mxu0
        %v1633 = vadd.f32 %v1375, %v1632
        %1634 = vdwg.mxu0
        %v1635 = vadd.f32 %v1445, %v536
        %v1636 = vadd.f32 %v1447, %v538
        %v1637 = vadd.f32 %v1451, %v542
        %v1638 = vadd.f32 %v1453, %v544
        %v1639 = vadd.f32 %v1457, %v548
        %v1640 = vadd.f32 %v1459, %v550
        %v1641 = vadd.f32 %v1463, %v554
        %v1642 = vadd.f32 %v1465, %v556
        %v1643 = vadd.f32 %v1469, %v560
        %v1644 = vadd.f32 %v1471, %v562
        %v1645 = vadd.f32 %v1475, %v566
        %v1646 = vadd.f32 %v1477, %v568
        %v1647 = vadd.f32 %v1481, %v572
        %v1648 = vadd.f32 %v1483, %v574
        %v1649 = vadd.f32 %v1487, %v578
        %v1650 = vadd.f32 %v1489, %v580
        %v1651 = vadd.f32 %v1493, %v584
        %v1652 = vadd.f32 %v1495, %v586
        %v1653 = vadd.f32 %v1499, %v590
        %v1654 = vadd.f32 %v1501, %v592
        %v1655 = vadd.f32 %v1505, %v596
        %v1656 = vadd.f32 %v1507, %v598
        %v1657 = vadd.f32 %v1511, %v602
        %v1658 = vadd.f32 %v1513, %v604
        %v1659 = vadd.f32 %v1517, %v608
        %v1660 = vadd.f32 %v1519, %v610
        %v1661 = vadd.f32 %v1523, %v614
        %v1662 = vadd.f32 %v1525, %v616
        %v1663 = vadd.f32 %v1529, %v620
        %v1664 = vadd.f32 %v1531, %v622
        %v1665 = vadd.f32 %v1535, %v626
        %v1666 = vadd.f32 %v1537, %v628
        %v1667 = vadd.f32 %v1541, %v632
        %v1668 = vadd.f32 %v1543, %v634
        %v1669 = vadd.f32 %v1547, %v638
        %v1670 = vadd.f32 %v1549, %v640
        %v1671 = vadd.f32 %v1553, %v644
        %v1672 = vadd.f32 %v1555, %v646
        %v1673 = vadd.f32 %v1559, %v650
        %v1674 = vadd.f32 %v1561, %v652
        %v1675 = vadd.f32 %v1565, %v656
        %v1676 = vadd.f32 %v1567, %v658
        %v1677 = vadd.f32 %v1571, %v662
        %v1678 = vadd.f32 %v1573, %v664
        %v1679 = vadd.f32 %v1577, %v668
        %v1680 = vadd.f32 %v1579, %v670
        %v1681 = vadd.f32 %v1583, %v674
        %v1682 = vadd.f32 %v1585, %v676
        %v1683 = vadd.f32 %v1589, %v680
        %v1684 = vadd.f32 %v1591, %v682
        %v1685 = vadd.f32 %v1595, %v686
        %v1686 = vadd.f32 %v1597, %v688
        %v1687 = vadd.f32 %v1601, %v692
        %v1688 = vadd.f32 %v1603, %v694
        %v1689 = vadd.f32 %v1607, %v698
        %v1690 = vadd.f32 %v1609, %v700
        %v1691 = vadd.f32 %v1613, %v704
        %v1692 = vadd.f32 %v1615, %v706
        %v1693 = vadd.f32 %v1619, %v710
        %v1694 = vadd.f32 %v1621, %v712
        %v1695 = vadd.f32 %v1625, %v716
        %v1696 = vadd.f32 %v1627, %v718
        %v1697 = vadd.f32 %v1631, %v722
        %v1698 = vadd.f32 %v1633, %v724
        %v1699 = vadd.f32 %v1635, %v1636
        %1700 = vadd.xlane.f32.xlu0 %v1699
        %v1701 = vpop.xlane.xlu0 %1700
        %v1702 = vadd.f32 %v1637, %v1638
        %1703 = vadd.xlane.f32.xlu0 %v1702
        %v1704 = vpop.xlane.xlu0 %1703
        %v1705 = vadd.f32 %v1639, %v1640
        %1706 = vadd.xlane.f32.xlu0 %v1705
        %v1707 = vpop.xlane.xlu0 %1706
        %v1708 = vadd.f32 %v1641, %v1642
        %1709 = vadd.xlane.f32.xlu0 %v1708
        %v1710 = vpop.xlane.xlu0 %1709
        %v1711 = vadd.f32 %v1643, %v1644
        %1712 = vadd.xlane.f32.xlu0 %v1711
        %v1713 = vpop.xlane.xlu0 %1712
        %v1714 = vadd.f32 %v1645, %v1646
        %1715 = vadd.xlane.f32.xlu0 %v1714
        %v1716 = vpop.xlane.xlu0 %1715
        %v1717 = vadd.f32 %v1647, %v1648
        %1718 = vadd.xlane.f32.xlu0 %v1717
        %v1719 = vpop.xlane.xlu0 %1718
        %v1720 = vadd.f32 %v1649, %v1650
        %1721 = vadd.xlane.f32.xlu0 %v1720
        %v1722 = vpop.xlane.xlu0 %1721
        %v1723 = vadd.f32 %v1651, %v1652
        %1724 = vadd.xlane.f32.xlu0 %v1723
        %v1725 = vpop.xlane.xlu0 %1724
        %v1726 = vadd.f32 %v1653, %v1654
        %1727 = vadd.xlane.f32.xlu0 %v1726
        %v1728 = vpop.xlane.xlu0 %1727
        %v1729 = vadd.f32 %v1655, %v1656
        %1730 = vadd.xlane.f32.xlu0 %v1729
        %v1731 = vpop.xlane.xlu0 %1730
        %v1732 = vadd.f32 %v1657, %v1658
        %1733 = vadd.xlane.f32.xlu0 %v1732
        %v1734 = vpop.xlane.xlu0 %1733
        %v1735 = vadd.f32 %v1659, %v1660
        %1736 = vadd.xlane.f32.xlu0 %v1735
        %v1737 = vpop.xlane.xlu0 %1736
        %v1738 = vadd.f32 %v1661, %v1662
        %1739 = vadd.xlane.f32.xlu0 %v1738
        %v1740 = vpop.xlane.xlu0 %1739
        %v1741 = vadd.f32 %v1663, %v1664
        %1742 = vadd.xlane.f32.xlu0 %v1741
        %v1743 = vpop.xlane.xlu0 %1742
        %v1744 = vadd.f32 %v1665, %v1666
        %1745 = vadd.xlane.f32.xlu0 %v1744
        %v1746 = vpop.xlane.xlu0 %1745
        %v1747 = vadd.f32 %v1667, %v1668
        %1748 = vadd.xlane.f32.xlu0 %v1747
        %v1749 = vpop.xlane.xlu0 %1748
        %v1750 = vadd.f32 %v1669, %v1670
        %1751 = vadd.xlane.f32.xlu0 %v1750
        %v1752 = vpop.xlane.xlu0 %1751
        %v1753 = vadd.f32 %v1671, %v1672
        %1754 = vadd.xlane.f32.xlu0 %v1753
        %v1755 = vpop.xlane.xlu0 %1754
        %v1756 = vadd.f32 %v1673, %v1674
        %1757 = vadd.xlane.f32.xlu0 %v1756
        %v1758 = vpop.xlane.xlu0 %1757
        %v1759 = vadd.f32 %v1675, %v1676
        %1760 = vadd.xlane.f32.xlu0 %v1759
        %v1761 = vpop.xlane.xlu0 %1760
        %v1762 = vadd.f32 %v1677, %v1678
        %1763 = vadd.xlane.f32.xlu0 %v1762
        %v1764 = vpop.xlane.xlu0 %1763
        %v1765 = vadd.f32 %v1679, %v1680
        %1766 = vadd.xlane.f32.xlu0 %v1765
        %v1767 = vpop.xlane.xlu0 %1766
        %v1768 = vadd.f32 %v1681, %v1682
        %1769 = vadd.xlane.f32.xlu0 %v1768
        %v1770 = vpop.xlane.xlu0 %1769
        %v1771 = vadd.f32 %v1683, %v1684
        %1772 = vadd.xlane.f32.xlu0 %v1771
        %v1773 = vpop.xlane.xlu0 %1772
        %v1774 = vadd.f32 %v1685, %v1686
        %1775 = vadd.xlane.f32.xlu0 %v1774
        %v1776 = vpop.xlane.xlu0 %1775
        %v1777 = vadd.f32 %v1687, %v1688
        %1778 = vadd.xlane.f32.xlu0 %v1777
        %v1779 = vpop.xlane.xlu0 %1778
        %v1780 = vadd.f32 %v1689, %v1690
        %1781 = vadd.xlane.f32.xlu0 %v1780
        %v1782 = vpop.xlane.xlu0 %1781
        %v1783 = vadd.f32 %v1691, %v1692
        %1784 = vadd.xlane.f32.xlu0 %v1783
        %v1785 = vpop.xlane.xlu0 %1784
        %v1786 = vadd.f32 %v1693, %v1694
        %1787 = vadd.xlane.f32.xlu0 %v1786
        %v1788 = vpop.xlane.xlu0 %1787
        %v1789 = vadd.f32 %v1695, %v1696
        %1790 = vadd.xlane.f32.xlu0 %v1789
        %v1791 = vpop.xlane.xlu0 %1790
        %v1792 = vadd.f32 %v1697, %v1698
        %1793 = vadd.xlane.f32.xlu0 %v1792
        %v1794 = vpop.xlane.xlu0 %1793
        %v1795 = vmul.f32 %v1701, 0.00390625
        %v1796 = vmul.f32 %v1704, 0.00390625
        %v1797 = vmul.f32 %v1707, 0.00390625
        %v1798 = vmul.f32 %v1710, 0.00390625
        %v1799 = vmul.f32 %v1713, 0.00390625
        %v1800 = vmul.f32 %v1716, 0.00390625
        %v1801 = vmul.f32 %v1719, 0.00390625
        %v1802 = vmul.f32 %v1722, 0.00390625
        %v1803 = vmul.f32 %v1725, 0.00390625
        %v1804 = vmul.f32 %v1728, 0.00390625
        %v1805 = vmul.f32 %v1731, 0.00390625
        %v1806 = vmul.f32 %v1734, 0.00390625
        %v1807 = vmul.f32 %v1737, 0.00390625
        %v1808 = vmul.f32 %v1740, 0.00390625
        %v1809 = vmul.f32 %v1743, 0.00390625
        %v1810 = vmul.f32 %v1746, 0.00390625
        %v1811 = vmul.f32 %v1749, 0.00390625
        %v1812 = vmul.f32 %v1752, 0.00390625
        %v1813 = vmul.f32 %v1755, 0.00390625
        %v1814 = vmul.f32 %v1758, 0.00390625
        %v1815 = vmul.f32 %v1761, 0.00390625
        %v1816 = vmul.f32 %v1764, 0.00390625
        %v1817 = vmul.f32 %v1767, 0.00390625
        %v1818 = vmul.f32 %v1770, 0.00390625
        %v1819 = vmul.f32 %v1773, 0.00390625
        %v1820 = vmul.f32 %v1776, 0.00390625
        %v1821 = vmul.f32 %v1779, 0.00390625
        %v1822 = vmul.f32 %v1782, 0.00390625
        %v1823 = vmul.f32 %v1785, 0.00390625
        %v1824 = vmul.f32 %v1788, 0.00390625
        %v1825 = vmul.f32 %v1791, 0.00390625
        %v1826 = vmul.f32 %v1794, 0.00390625
        %v1827 = vmul.f32 %v1635, %v1635
        %v1828 = vmul.f32 %v1636, %v1636
        %v1829 = vmul.f32 %v1637, %v1637
        %v1830 = vmul.f32 %v1638, %v1638
        %v1831 = vmul.f32 %v1639, %v1639
        %v1832 = vmul.f32 %v1640, %v1640
        %v1833 = vmul.f32 %v1641, %v1641
        %v1834 = vmul.f32 %v1642, %v1642
        %v1835 = vmul.f32 %v1643, %v1643
        %v1836 = vmul.f32 %v1644, %v1644
        %v1837 = vmul.f32 %v1645, %v1645
        %v1838 = vmul.f32 %v1646, %v1646
        %v1839 = vmul.f32 %v1647, %v1647
        %v1840 = vmul.f32 %v1648, %v1648
        %v1841 = vmul.f32 %v1649, %v1649
        %v1842 = vmul.f32 %v1650, %v1650
        %v1843 = vmul.f32 %v1651, %v1651
        %v1844 = vmul.f32 %v1652, %v1652
        %v1845 = vmul.f32 %v1653, %v1653
        %v1846 = vmul.f32 %v1654, %v1654
        %v1847 = vmul.f32 %v1655, %v1655
        %v1848 = vmul.f32 %v1656, %v1656
        %v1849 = vmul.f32 %v1657, %v1657
        %v1850 = vmul.f32 %v1658, %v1658
        %v1851 = vmul.f32 %v1659, %v1659
        %v1852 = vmul.f32 %v1660, %v1660
        %v1853 = vmul.f32 %v1661, %v1661
        %v1854 = vmul.f32 %v1662, %v1662
        %v1855 = vmul.f32 %v1663, %v1663
        %v1856 = vmul.f32 %v1664, %v1664
        %v1857 = vmul.f32 %v1665, %v1665
        %v1858 = vmul.f32 %v1666, %v1666
        %v1859 = vmul.f32 %v1667, %v1667
        %v1860 = vmul.f32 %v1668, %v1668
        %v1861 = vmul.f32 %v1669, %v1669
        %v1862 = vmul.f32 %v1670, %v1670
        %v1863 = vmul.f32 %v1671, %v1671
        %v1864 = vmul.f32 %v1672, %v1672
        %v1865 = vmul.f32 %v1673, %v1673
        %v1866 = vmul.f32 %v1674, %v1674
        %v1867 = vmul.f32 %v1675, %v1675
        %v1868 = vmul.f32 %v1676, %v1676
        %v1869 = vmul.f32 %v1677, %v1677
        %v1870 = vmul.f32 %v1678, %v1678
        %v1871 = vmul.f32 %v1679, %v1679
        %v1872 = vmul.f32 %v1680, %v1680
        %v1873 = vmul.f32 %v1681, %v1681
        %v1874 = vmul.f32 %v1682, %v1682
        %v1875 = vmul.f32 %v1683, %v1683
        %v1876 = vmul.f32 %v1684, %v1684
        %v1877 = vmul.f32 %v1685, %v1685
        %v1878 = vmul.f32 %v1686, %v1686
        %v1879 = vmul.f32 %v1687, %v1687
        %v1880 = vmul.f32 %v1688, %v1688
        %v1881 = vmul.f32 %v1689, %v1689
        %v1882 = vmul.f32 %v1690, %v1690
        %v1883 = vmul.f32 %v1691, %v1691
        %v1884 = vmul.f32 %v1692, %v1692
        %v1885 = vmul.f32 %v1693, %v1693
        %v1886 = vmul.f32 %v1694, %v1694
        %v1887 = vmul.f32 %v1695, %v1695
        %v1888 = vmul.f32 %v1696, %v1696
        %v1889 = vmul.f32 %v1697, %v1697
        %v1890 = vmul.f32 %v1698, %v1698
        %v1891 = vadd.f32 %v1827, %v1828
        %1892 = vadd.xlane.f32.xlu0 %v1891
        %v1893 = vpop.xlane.xlu0 %1892
        %v1894 = vadd.f32 %v1829, %v1830
        %1895 = vadd.xlane.f32.xlu0 %v1894
        %v1896 = vpop.xlane.xlu0 %1895
        %v1897 = vadd.f32 %v1831, %v1832
        %1898 = vadd.xlane.f32.xlu0 %v1897
        %v1899 = vpop.xlane.xlu0 %1898
        %v1900 = vadd.f32 %v1833, %v1834
        %1901 = vadd.xlane.f32.xlu0 %v1900
        %v1902 = vpop.xlane.xlu0 %1901
        %v1903 = vadd.f32 %v1835, %v1836
        %1904 = vadd.xlane.f32.xlu0 %v1903
        %v1905 = vpop.xlane.xlu0 %1904
        %v1906 = vadd.f32 %v1837, %v1838
        %1907 = vadd.xlane.f32.xlu0 %v1906
        %v1908 = vpop.xlane.xlu0 %1907
        %v1909 = vadd.f32 %v1839, %v1840
        %1910 = vadd.xlane.f32.xlu0 %v1909
        %v1911 = vpop.xlane.xlu0 %1910
        %v1912 = vadd.f32 %v1841, %v1842
        %1913 = vadd.xlane.f32.xlu0 %v1912
        %v1914 = vpop.xlane.xlu0 %1913
        %v1915 = vadd.f32 %v1843, %v1844
        %1916 = vadd.xlane.f32.xlu0 %v1915
        %v1917 = vpop.xlane.xlu0 %1916
        %v1918 = vadd.f32 %v1845, %v1846
        %1919 = vadd.xlane.f32.xlu0 %v1918
        %v1920 = vpop.xlane.xlu0 %1919
        %v1921 = vadd.f32 %v1847, %v1848
        %1922 = vadd.xlane.f32.xlu0 %v1921
        %v1923 = vpop.xlane.xlu0 %1922
        %v1924 = vadd.f32 %v1849, %v1850
        %1925 = vadd.xlane.f32.xlu0 %v1924
        %v1926 = vpop.xlane.xlu0 %1925
        %v1927 = vadd.f32 %v1851, %v1852
        %1928 = vadd.xlane.f32.xlu0 %v1927
        %v1929 = vpop.xlane.xlu0 %1928
        %v1930 = vadd.f32 %v1853, %v1854
        %1931 = vadd.xlane.f32.xlu0 %v1930
        %v1932 = vpop.xlane.xlu0 %1931
        %v1933 = vadd.f32 %v1855, %v1856
        %1934 = vadd.xlane.f32.xlu0 %v1933
        %v1935 = vpop.xlane.xlu0 %1934
        %v1936 = vadd.f32 %v1857, %v1858
        %1937 = vadd.xlane.f32.xlu0 %v1936
        %v1938 = vpop.xlane.xlu0 %1937
        %v1939 = vadd.f32 %v1859, %v1860
        %1940 = vadd.xlane.f32.xlu0 %v1939
        %v1941 = vpop.xlane.xlu0 %1940
        %v1942 = vadd.f32 %v1861, %v1862
        %1943 = vadd.xlane.f32.xlu0 %v1942
        %v1944 = vpop.xlane.xlu0 %1943
        %v1945 = vadd.f32 %v1863, %v1864
        %1946 = vadd.xlane.f32.xlu0 %v1945
        %v1947 = vpop.xlane.xlu0 %1946
        %v1948 = vadd.f32 %v1865, %v1866
        %1949 = vadd.xlane.f32.xlu0 %v1948
        %v1950 = vpop.xlane.xlu0 %1949
        %v1951 = vadd.f32 %v1867, %v1868
        %1952 = vadd.xlane.f32.xlu0 %v1951
        %v1953 = vpop.xlane.xlu0 %1952
        %v1954 = vadd.f32 %v1869, %v1870
        %1955 = vadd.xlane.f32.xlu0 %v1954
        %v1956 = vpop.xlane.xlu0 %1955
        %v1957 = vadd.f32 %v1871, %v1872
        %1958 = vadd.xlane.f32.xlu0 %v1957
        %v1959 = vpop.xlane.xlu0 %1958
        %v1960 = vadd.f32 %v1873, %v1874
        %1961 = vadd.xlane.f32.xlu0 %v1960
        %v1962 = vpop.xlane.xlu0 %1961
        %v1963 = vadd.f32 %v1875, %v1876
        %1964 = vadd.xlane.f32.xlu0 %v1963
        %v1965 = vpop.xlane.xlu0 %1964
        %v1966 = vadd.f32 %v1877, %v1878
        %1967 = vadd.xlane.f32.xlu0 %v1966
        %v1968 = vpop.xlane.xlu0 %1967
        %v1969 = vadd.f32 %v1879, %v1880
        %1970 = vadd.xlane.f32.xlu0 %v1969
        %v1971 = vpop.xlane.xlu0 %1970
        %v1972 = vadd.f32 %v1881, %v1882
        %1973 = vadd.xlane.f32.xlu0 %v1972
        %v1974 = vpop.xlane.xlu0 %1973
        %v1975 = vadd.f32 %v1883, %v1884
        %1976 = vadd.xlane.f32.xlu0 %v1975
        %v1977 = vpop.xlane.xlu0 %1976
        %v1978 = vadd.f32 %v1885, %v1886
        %1979 = vadd.xlane.f32.xlu0 %v1978
        %v1980 = vpop.xlane.xlu0 %1979
        %v1981 = vadd.f32 %v1887, %v1888
        %1982 = vadd.xlane.f32.xlu0 %v1981
        %v1983 = vpop.xlane.xlu0 %1982
        %v1984 = vadd.f32 %v1889, %v1890
        %1985 = vadd.xlane.f32.xlu0 %v1984
        %v1986 = vpop.xlane.xlu0 %1985
        %v1987 = vmul.f32 %v1893, 0.00390625
        %v1988 = vmul.f32 %v1896, 0.00390625
        %v1989 = vmul.f32 %v1899, 0.00390625
        %v1990 = vmul.f32 %v1902, 0.00390625
        %v1991 = vmul.f32 %v1905, 0.00390625
        %v1992 = vmul.f32 %v1908, 0.00390625
        %v1993 = vmul.f32 %v1911, 0.00390625
        %v1994 = vmul.f32 %v1914, 0.00390625
        %v1995 = vmul.f32 %v1917, 0.00390625
        %v1996 = vmul.f32 %v1920, 0.00390625
        %v1997 = vmul.f32 %v1923, 0.00390625
        %v1998 = vmul.f32 %v1926, 0.00390625
        %v1999 = vmul.f32 %v1929, 0.00390625
        %v2000 = vmul.f32 %v1932, 0.00390625
        %v2001 = vmul.f32 %v1935, 0.00390625
        %v2002 = vmul.f32 %v1938, 0.00390625
        %v2003 = vmul.f32 %v1941, 0.00390625
        %v2004 = vmul.f32 %v1944, 0.00390625
        %v2005 = vmul.f32 %v1947, 0.00390625
        %v2006 = vmul.f32 %v1950, 0.00390625
        %v2007 = vmul.f32 %v1953, 0.00390625
        %v2008 = vmul.f32 %v1956, 0.00390625
        %v2009 = vmul.f32 %v1959, 0.00390625
        %v2010 = vmul.f32 %v1962, 0.00390625
        %v2011 = vmul.f32 %v1965, 0.00390625
        %v2012 = vmul.f32 %v1968, 0.00390625
        %v2013 = vmul.f32 %v1971, 0.00390625
        %v2014 = vmul.f32 %v1974, 0.00390625
        %v2015 = vmul.f32 %v1977, 0.00390625
        %v2016 = vmul.f32 %v1980, 0.00390625
        %v2017 = vmul.f32 %v1983, 0.00390625
        %v2018 = vmul.f32 %v1986, 0.00390625
        %v2019 = vmul.f32 %v1795, %v1795
        %v2020 = vmul.f32 %v1796, %v1796
        %v2021 = vmul.f32 %v1797, %v1797
        %v2022 = vmul.f32 %v1798, %v1798
        %v2023 = vmul.f32 %v1799, %v1799
        %v2024 = vmul.f32 %v1800, %v1800
        %v2025 = vmul.f32 %v1801, %v1801
        %v2026 = vmul.f32 %v1802, %v1802
        %v2027 = vmul.f32 %v1803, %v1803
        %v2028 = vmul.f32 %v1804, %v1804
        %v2029 = vmul.f32 %v1805, %v1805
        %v2030 = vmul.f32 %v1806, %v1806
        %v2031 = vmul.f32 %v1807, %v1807
        %v2032 = vmul.f32 %v1808, %v1808
        %v2033 = vmul.f32 %v1809, %v1809
        %v2034 = vmul.f32 %v1810, %v1810
        %v2035 = vmul.f32 %v1811, %v1811
        %v2036 = vmul.f32 %v1812, %v1812
        %v2037 = vmul.f32 %v1813, %v1813
        %v2038 = vmul.f32 %v1814, %v1814
        %v2039 = vmul.f32 %v1815, %v1815
        %v2040 = vmul.f32 %v1816, %v1816
        %v2041 = vmul.f32 %v1817, %v1817
        %v2042 = vmul.f32 %v1818, %v1818
        %v2043 = vmul.f32 %v1819, %v1819
        %v2044 = vmul.f32 %v1820, %v1820
        %v2045 = vmul.f32 %v1821, %v1821
        %v2046 = vmul.f32 %v1822, %v1822
        %v2047 = vmul.f32 %v1823, %v1823
        %v2048 = vmul.f32 %v1824, %v1824
        %v2049 = vmul.f32 %v1825, %v1825
        %v2050 = vmul.f32 %v1826, %v1826
        %v2051 = vsub.f32 %v1987, %v2019
        %v2052 = vsub.f32 %v1988, %v2020
        %v2053 = vsub.f32 %v1989, %v2021
        %v2054 = vsub.f32 %v1990, %v2022
        %v2055 = vsub.f32 %v1991, %v2023
        %v2056 = vsub.f32 %v1992, %v2024
        %v2057 = vsub.f32 %v1993, %v2025
        %v2058 = vsub.f32 %v1994, %v2026
        %v2059 = vsub.f32 %v1995, %v2027
        %v2060 = vsub.f32 %v1996, %v2028
        %v2061 = vsub.f32 %v1997, %v2029
        %v2062 = vsub.f32 %v1998, %v2030
        %v2063 = vsub.f32 %v1999, %v2031
        %v2064 = vsub.f32 %v2000, %v2032
        %v2065 = vsub.f32 %v2001, %v2033
        %v2066 = vsub.f32 %v2002, %v2034
        %v2067 = vsub.f32 %v2003, %v2035
        %v2068 = vsub.f32 %v2004, %v2036
        %v2069 = vsub.f32 %v2005, %v2037
        %v2070 = vsub.f32 %v2006, %v2038
        %v2071 = vsub.f32 %v2007, %v2039
        %v2072 = vsub.f32 %v2008, %v2040
        %v2073 = vsub.f32 %v2009, %v2041
        %v2074 = vsub.f32 %v2010, %v2042
        %v2075 = vsub.f32 %v2011, %v2043
        %v2076 = vsub.f32 %v2012, %v2044
        %v2077 = vsub.f32 %v2013, %v2045
        %v2078 = vsub.f32 %v2014, %v2046
        %v2079 = vsub.f32 %v2015, %v2047
        %v2080 = vsub.f32 %v2016, %v2048
        %v2081 = vsub.f32 %v2017, %v2049
        %v2082 = vsub.f32 %v2018, %v2050
        %v2083 = vmax.f32 %v2051, 0.0
        %v2084 = vmax.f32 %v2052, 0.0
        %v2085 = vmax.f32 %v2053, 0.0
        %v2086 = vmax.f32 %v2054, 0.0
        %v2087 = vmax.f32 %v2055, 0.0
        %v2088 = vmax.f32 %v2056, 0.0
        %v2089 = vmax.f32 %v2057, 0.0
        %v2090 = vmax.f32 %v2058, 0.0
        %v2091 = vmax.f32 %v2059, 0.0
        %v2092 = vmax.f32 %v2060, 0.0
        %v2093 = vmax.f32 %v2061, 0.0
        %v2094 = vmax.f32 %v2062, 0.0
        %v2095 = vmax.f32 %v2063, 0.0
        %v2096 = vmax.f32 %v2064, 0.0
        %v2097 = vmax.f32 %v2065, 0.0
        %v2098 = vmax.f32 %v2066, 0.0
        %v2099 = vmax.f32 %v2067, 0.0
        %v2100 = vmax.f32 %v2068, 0.0
        %v2101 = vmax.f32 %v2069, 0.0
        %v2102 = vmax.f32 %v2070, 0.0
        %v2103 = vmax.f32 %v2071, 0.0
        %v2104 = vmax.f32 %v2072, 0.0
        %v2105 = vmax.f32 %v2073, 0.0
        %v2106 = vmax.f32 %v2074, 0.0
        %v2107 = vmax.f32 %v2075, 0.0
        %v2108 = vmax.f32 %v2076, 0.0
        %v2109 = vmax.f32 %v2077, 0.0
        %v2110 = vmax.f32 %v2078, 0.0
        %v2111 = vmax.f32 %v2079, 0.0
        %v2112 = vmax.f32 %v2080, 0.0
        %v2113 = vmax.f32 %v2081, 0.0
        %v2114 = vmax.f32 %v2082, 0.0
        %v2115 = vsub.f32 %v1635, %v1795
        %v2116 = vsub.f32 %v1636, %v1795
        %v2117 = vsub.f32 %v1637, %v1796
        %v2118 = vsub.f32 %v1638, %v1796
        %v2119 = vsub.f32 %v1639, %v1797
        %v2120 = vsub.f32 %v1640, %v1797
        %v2121 = vsub.f32 %v1641, %v1798
        %v2122 = vsub.f32 %v1642, %v1798
        %v2123 = vsub.f32 %v1643, %v1799
        %v2124 = vsub.f32 %v1644, %v1799
        %v2125 = vsub.f32 %v1645, %v1800
        %v2126 = vsub.f32 %v1646, %v1800
        %v2127 = vsub.f32 %v1647, %v1801
        %v2128 = vsub.f32 %v1648, %v1801
        %v2129 = vsub.f32 %v1649, %v1802
        %v2130 = vsub.f32 %v1650, %v1802
        %v2131 = vsub.f32 %v1651, %v1803
        %v2132 = vsub.f32 %v1652, %v1803
        %v2133 = vsub.f32 %v1653, %v1804
        %v2134 = vsub.f32 %v1654, %v1804
        %v2135 = vsub.f32 %v1655, %v1805
        %v2136 = vsub.f32 %v1656, %v1805
        %v2137 = vsub.f32 %v1657, %v1806
        %v2138 = vsub.f32 %v1658, %v1806
        %v2139 = vsub.f32 %v1659, %v1807
        %v2140 = vsub.f32 %v1660, %v1807
        %v2141 = vsub.f32 %v1661, %v1808
        %v2142 = vsub.f32 %v1662, %v1808
        %v2143 = vsub.f32 %v1663, %v1809
        %v2144 = vsub.f32 %v1664, %v1809
        %v2145 = vsub.f32 %v1665, %v1810
        %v2146 = vsub.f32 %v1666, %v1810
        %v2147 = vsub.f32 %v1667, %v1811
        %v2148 = vsub.f32 %v1668, %v1811
        %v2149 = vsub.f32 %v1669, %v1812
        %v2150 = vsub.f32 %v1670, %v1812
        %v2151 = vsub.f32 %v1671, %v1813
        %v2152 = vsub.f32 %v1672, %v1813
        %v2153 = vsub.f32 %v1673, %v1814
        %v2154 = vsub.f32 %v1674, %v1814
        %v2155 = vsub.f32 %v1675, %v1815
        %v2156 = vsub.f32 %v1676, %v1815
        %v2157 = vsub.f32 %v1677, %v1816
        %v2158 = vsub.f32 %v1678, %v1816
        %v2159 = vsub.f32 %v1679, %v1817
        %v2160 = vsub.f32 %v1680, %v1817
        %v2161 = vsub.f32 %v1681, %v1818
        %v2162 = vsub.f32 %v1682, %v1818
        %v2163 = vsub.f32 %v1683, %v1819
        %v2164 = vsub.f32 %v1684, %v1819
        %v2165 = vsub.f32 %v1685, %v1820
        %v2166 = vsub.f32 %v1686, %v1820
        %v2167 = vsub.f32 %v1687, %v1821
        %v2168 = vsub.f32 %v1688, %v1821
        %v2169 = vsub.f32 %v1689, %v1822
        %v2170 = vsub.f32 %v1690, %v1822
        %v2171 = vsub.f32 %v1691, %v1823
        %v2172 = vsub.f32 %v1692, %v1823
        %v2173 = vsub.f32 %v1693, %v1824
        %v2174 = vsub.f32 %v1694, %v1824
        %v2175 = vsub.f32 %v1695, %v1825
        %v2176 = vsub.f32 %v1696, %v1825
        %v2177 = vsub.f32 %v1697, %v1826
        %v2178 = vsub.f32 %v1698, %v1826
        %v2179 = vadd.f32 %v2083, 1e-05
        %v2180 = vadd.f32 %v2084, 1e-05
        %v2181 = vadd.f32 %v2085, 1e-05
        %v2182 = vadd.f32 %v2086, 1e-05
        %v2183 = vadd.f32 %v2087, 1e-05
        %v2184 = vadd.f32 %v2088, 1e-05
        %v2185 = vadd.f32 %v2089, 1e-05
        %v2186 = vadd.f32 %v2090, 1e-05
        %v2187 = vadd.f32 %v2091, 1e-05
        %v2188 = vadd.f32 %v2092, 1e-05
        %v2189 = vadd.f32 %v2093, 1e-05
        %v2190 = vadd.f32 %v2094, 1e-05
        %v2191 = vadd.f32 %v2095, 1e-05
        %v2192 = vadd.f32 %v2096, 1e-05
        %v2193 = vadd.f32 %v2097, 1e-05
        %v2194 = vadd.f32 %v2098, 1e-05
        %v2195 = vadd.f32 %v2099, 1e-05
        %v2196 = vadd.f32 %v2100, 1e-05
        %v2197 = vadd.f32 %v2101, 1e-05
        %v2198 = vadd.f32 %v2102, 1e-05
        %v2199 = vadd.f32 %v2103, 1e-05
        %v2200 = vadd.f32 %v2104, 1e-05
        %v2201 = vadd.f32 %v2105, 1e-05
        %v2202 = vadd.f32 %v2106, 1e-05
        %v2203 = vadd.f32 %v2107, 1e-05
        %v2204 = vadd.f32 %v2108, 1e-05
        %v2205 = vadd.f32 %v2109, 1e-05
        %v2206 = vadd.f32 %v2110, 1e-05
        %v2207 = vadd.f32 %v2111, 1e-05
        %v2208 = vadd.f32 %v2112, 1e-05
        %v2209 = vadd.f32 %v2113, 1e-05
        %v2210 = vadd.f32 %v2114, 1e-05
        %v2211 = vrsqrt.pop %v2179
        %v2212 = vrsqrt.pop %v2180
        %v2213 = vrsqrt.pop %v2181
        %v2214 = vrsqrt.pop %v2182
        %v2215 = vrsqrt.pop %v2183
        %v2216 = vrsqrt.pop %v2184
        %v2217 = vrsqrt.pop %v2185
        %v2218 = vrsqrt.pop %v2186
        %v2219 = vrsqrt.pop %v2187
        %v2220 = vrsqrt.pop %v2188
        %v2221 = vrsqrt.pop %v2189
        %v2222 = vrsqrt.pop %v2190
        %v2223 = vrsqrt.pop %v2191
        %v2224 = vrsqrt.pop %v2192
        %v2225 = vrsqrt.pop %v2193
        %v2226 = vrsqrt.pop %v2194
        %v2227 = vrsqrt.pop %v2195
        %v2228 = vrsqrt.pop %v2196
        %v2229 = vrsqrt.pop %v2197
        %v2230 = vrsqrt.pop %v2198
        %v2231 = vrsqrt.pop %v2199
        %v2232 = vrsqrt.pop %v2200
        %v2233 = vrsqrt.pop %v2201
        %v2234 = vrsqrt.pop %v2202
        %v2235 = vrsqrt.pop %v2203
        %v2236 = vrsqrt.pop %v2204
        %v2237 = vrsqrt.pop %v2205
        %v2238 = vrsqrt.pop %v2206
        %v2239 = vrsqrt.pop %v2207
        %v2240 = vrsqrt.pop %v2208
        %v2241 = vrsqrt.pop %v2209
        %v2242 = vrsqrt.pop %v2210
        %v2243 = vmul.f32 %v2115, %v2211
        %v2244 = vmul.f32 %v2116, %v2211
        %v2245 = vmul.f32 %v2117, %v2212
        %v2246 = vmul.f32 %v2118, %v2212
        %v2247 = vmul.f32 %v2119, %v2213
        %v2248 = vmul.f32 %v2120, %v2213
        %v2249 = vmul.f32 %v2121, %v2214
        %v2250 = vmul.f32 %v2122, %v2214
        %v2251 = vmul.f32 %v2123, %v2215
        %v2252 = vmul.f32 %v2124, %v2215
        %v2253 = vmul.f32 %v2125, %v2216
        %v2254 = vmul.f32 %v2126, %v2216
        %v2255 = vmul.f32 %v2127, %v2217
        %v2256 = vmul.f32 %v2128, %v2217
        %v2257 = vmul.f32 %v2129, %v2218
        %v2258 = vmul.f32 %v2130, %v2218
        %v2259 = vmul.f32 %v2131, %v2219
        %v2260 = vmul.f32 %v2132, %v2219
        %v2261 = vmul.f32 %v2133, %v2220
        %v2262 = vmul.f32 %v2134, %v2220
        %v2263 = vmul.f32 %v2135, %v2221
        %v2264 = vmul.f32 %v2136, %v2221
        %v2265 = vmul.f32 %v2137, %v2222
        %v2266 = vmul.f32 %v2138, %v2222
        %v2267 = vmul.f32 %v2139, %v2223
        %v2268 = vmul.f32 %v2140, %v2223
        %v2269 = vmul.f32 %v2141, %v2224
        %v2270 = vmul.f32 %v2142, %v2224
        %v2271 = vmul.f32 %v2143, %v2225
        %v2272 = vmul.f32 %v2144, %v2225
        %v2273 = vmul.f32 %v2145, %v2226
        %v2274 = vmul.f32 %v2146, %v2226
        %v2275 = vmul.f32 %v2147, %v2227
        %v2276 = vmul.f32 %v2148, %v2227
        %v2277 = vmul.f32 %v2149, %v2228
        %v2278 = vmul.f32 %v2150, %v2228
        %v2279 = vmul.f32 %v2151, %v2229
        %v2280 = vmul.f32 %v2152, %v2229
        %v2281 = vmul.f32 %v2153, %v2230
        %v2282 = vmul.f32 %v2154, %v2230
        %v2283 = vmul.f32 %v2155, %v2231
        %v2284 = vmul.f32 %v2156, %v2231
        %v2285 = vmul.f32 %v2157, %v2232
        %v2286 = vmul.f32 %v2158, %v2232
        %v2287 = vmul.f32 %v2159, %v2233
        %v2288 = vmul.f32 %v2160, %v2233
        %v2289 = vmul.f32 %v2161, %v2234
        %v2290 = vmul.f32 %v2162, %v2234
        %v2291 = vmul.f32 %v2163, %v2235
        %v2292 = vmul.f32 %v2164, %v2235
        %v2293 = vmul.f32 %v2165, %v2236
        %v2294 = vmul.f32 %v2166, %v2236
        %v2295 = vmul.f32 %v2167, %v2237
        %v2296 = vmul.f32 %v2168, %v2237
        %v2297 = vmul.f32 %v2169, %v2238
        %v2298 = vmul.f32 %v2170, %v2238
        %v2299 = vmul.f32 %v2171, %v2239
        %v2300 = vmul.f32 %v2172, %v2239
        %v2301 = vmul.f32 %v2173, %v2240
        %v2302 = vmul.f32 %v2174, %v2240
        %v2303 = vmul.f32 %v2175, %v2241
        %v2304 = vmul.f32 %v2176, %v2241
        %v2305 = vmul.f32 %v2177, %v2242
        %v2306 = vmul.f32 %v2178, %v2242
        %v2307 = vld [vmem:[%s5] sm:$0x3]
        %v2309 = vlaneseq
        %v2310 = vshrl.u32 %v2309, 7
        %v2311 = vsub.s32 0, %v2310
        %v2312 = vrot.slane %v2307, %v2311
        %v2313 = vlaneseq
        %v2314 = vshrl.u32 %v2313, 7
        %v2315 = vsub.s32 1, %v2314
        %v2316 = vrot.slane %v2307, %v2315
        %v2319 = vmul.f32 %v2243, %v2312
        %v2320 = vmul.f32 %v2244, %v2316
        %v2321 = vmul.f32 %v2245, %v2312
        %v2322 = vmul.f32 %v2246, %v2316
        %v2323 = vmul.f32 %v2247, %v2312
        %v2324 = vmul.f32 %v2248, %v2316
        %v2325 = vmul.f32 %v2249, %v2312
        %v2326 = vmul.f32 %v2250, %v2316
        %v2327 = vmul.f32 %v2251, %v2312
        %v2328 = vmul.f32 %v2252, %v2316
        %v2329 = vmul.f32 %v2253, %v2312
        %v2330 = vmul.f32 %v2254, %v2316
        %v2331 = vmul.f32 %v2255, %v2312
        %v2332 = vmul.f32 %v2256, %v2316
        %v2333 = vmul.f32 %v2257, %v2312
        %v2334 = vmul.f32 %v2258, %v2316
        %v2335 = vmul.f32 %v2259, %v2312
        %v2336 = vmul.f32 %v2260, %v2316
        %v2337 = vmul.f32 %v2261, %v2312
        %v2338 = vmul.f32 %v2262, %v2316
        %v2339 = vmul.f32 %v2263, %v2312
        %v2340 = vmul.f32 %v2264, %v2316
        %v2341 = vmul.f32 %v2265, %v2312
        %v2342 = vmul.f32 %v2266, %v2316
        %v2343 = vmul.f32 %v2267, %v2312
        %v2344 = vmul.f32 %v2268, %v2316
        %v2345 = vmul.f32 %v2269, %v2312
        %v2346 = vmul.f32 %v2270, %v2316
        %v2347 = vmul.f32 %v2271, %v2312
        %v2348 = vmul.f32 %v2272, %v2316
        %v2349 = vmul.f32 %v2273, %v2312
        %v2350 = vmul.f32 %v2274, %v2316
        %v2351 = vmul.f32 %v2275, %v2312
        %v2352 = vmul.f32 %v2276, %v2316
        %v2353 = vmul.f32 %v2277, %v2312
        %v2354 = vmul.f32 %v2278, %v2316
        %v2355 = vmul.f32 %v2279, %v2312
        %v2356 = vmul.f32 %v2280, %v2316
        %v2357 = vmul.f32 %v2281, %v2312
        %v2358 = vmul.f32 %v2282, %v2316
        %v2359 = vmul.f32 %v2283, %v2312
        %v2360 = vmul.f32 %v2284, %v2316
        %v2361 = vmul.f32 %v2285, %v2312
        %v2362 = vmul.f32 %v2286, %v2316
        %v2363 = vmul.f32 %v2287, %v2312
        %v2364 = vmul.f32 %v2288, %v2316
        %v2365 = vmul.f32 %v2289, %v2312
        %v2366 = vmul.f32 %v2290, %v2316
        %v2367 = vmul.f32 %v2291, %v2312
        %v2368 = vmul.f32 %v2292, %v2316
        %v2369 = vmul.f32 %v2293, %v2312
        %v2370 = vmul.f32 %v2294, %v2316
        %v2371 = vmul.f32 %v2295, %v2312
        %v2372 = vmul.f32 %v2296, %v2316
        %v2373 = vmul.f32 %v2297, %v2312
        %v2374 = vmul.f32 %v2298, %v2316
        %v2375 = vmul.f32 %v2299, %v2312
        %v2376 = vmul.f32 %v2300, %v2316
        %v2377 = vmul.f32 %v2301, %v2312
        %v2378 = vmul.f32 %v2302, %v2316
        %v2379 = vmul.f32 %v2303, %v2312
        %v2380 = vmul.f32 %v2304, %v2316
        %v2381 = vmul.f32 %v2305, %v2312
        %v2382 = vmul.f32 %v2306, %v2316
        %v2383 = vld [vmem:[%s6] sm:$0x3]
        %v2385 = vlaneseq
        %v2386 = vshrl.u32 %v2385, 7
        %v2387 = vsub.s32 0, %v2386
        %v2388 = vrot.slane %v2383, %v2387
        %v2389 = vlaneseq
        %v2390 = vshrl.u32 %v2389, 7
        %v2391 = vsub.s32 1, %v2390
        %v2392 = vrot.slane %v2383, %v2391
        %v2395 = vadd.f32 %v2319, %v2388
        %v2396 = vadd.f32 %v2320, %v2392
        %v2397 = vadd.f32 %v2321, %v2388
        %v2398 = vadd.f32 %v2322, %v2392
        %v2399 = vadd.f32 %v2323, %v2388
        %v2400 = vadd.f32 %v2324, %v2392
        %v2401 = vadd.f32 %v2325, %v2388
        %v2402 = vadd.f32 %v2326, %v2392
        %v2403 = vadd.f32 %v2327, %v2388
        %v2404 = vadd.f32 %v2328, %v2392
        %v2405 = vadd.f32 %v2329, %v2388
        %v2406 = vadd.f32 %v2330, %v2392
        %v2407 = vadd.f32 %v2331, %v2388
        %v2408 = vadd.f32 %v2332, %v2392
        %v2409 = vadd.f32 %v2333, %v2388
        %v2410 = vadd.f32 %v2334, %v2392
        %v2411 = vadd.f32 %v2335, %v2388
        %v2412 = vadd.f32 %v2336, %v2392
        %v2413 = vadd.f32 %v2337, %v2388
        %v2414 = vadd.f32 %v2338, %v2392
        %v2415 = vadd.f32 %v2339, %v2388
        %v2416 = vadd.f32 %v2340, %v2392
        %v2417 = vadd.f32 %v2341, %v2388
        %v2418 = vadd.f32 %v2342, %v2392
        %v2419 = vadd.f32 %v2343, %v2388
        %v2420 = vadd.f32 %v2344, %v2392
        %v2421 = vadd.f32 %v2345, %v2388
        %v2422 = vadd.f32 %v2346, %v2392
        %v2423 = vadd.f32 %v2347, %v2388
        %v2424 = vadd.f32 %v2348, %v2392
        %v2425 = vadd.f32 %v2349, %v2388
        %v2426 = vadd.f32 %v2350, %v2392
        %v2427 = vadd.f32 %v2351, %v2388
        %v2428 = vadd.f32 %v2352, %v2392
        %v2429 = vadd.f32 %v2353, %v2388
        %v2430 = vadd.f32 %v2354, %v2392
        %v2431 = vadd.f32 %v2355, %v2388
        %v2432 = vadd.f32 %v2356, %v2392
        %v2433 = vadd.f32 %v2357, %v2388
        %v2434 = vadd.f32 %v2358, %v2392
        %v2435 = vadd.f32 %v2359, %v2388
        %v2436 = vadd.f32 %v2360, %v2392
        %v2437 = vadd.f32 %v2361, %v2388
        %v2438 = vadd.f32 %v2362, %v2392
        %v2439 = vadd.f32 %v2363, %v2388
        %v2440 = vadd.f32 %v2364, %v2392
        %v2441 = vadd.f32 %v2365, %v2388
        %v2442 = vadd.f32 %v2366, %v2392
        %v2443 = vadd.f32 %v2367, %v2388
        %v2444 = vadd.f32 %v2368, %v2392
        %v2445 = vadd.f32 %v2369, %v2388
        %v2446 = vadd.f32 %v2370, %v2392
        %v2447 = vadd.f32 %v2371, %v2388
        %v2448 = vadd.f32 %v2372, %v2392
        %v2449 = vadd.f32 %v2373, %v2388
        %v2450 = vadd.f32 %v2374, %v2392
        %v2451 = vadd.f32 %v2375, %v2388
        %v2452 = vadd.f32 %v2376, %v2392
        %v2453 = vadd.f32 %v2377, %v2388
        %v2454 = vadd.f32 %v2378, %v2392
        %v2455 = vadd.f32 %v2379, %v2388
        %v2456 = vadd.f32 %v2380, %v2392
        %v2457 = vadd.f32 %v2381, %v2388
        %v2458 = vadd.f32 %v2382, %v2392
        %2459 = vst [vmem:[%s326] sm:$0xff] %v2395
        %2460 = vst [vmem:[%s326 + $0x8] sm:$0xff] %v2396
        %2461 = vst [vmem:[%s326 + $0x10] sm:$0xff] %v2397
        %2462 = vst [vmem:[%s326 + $0x18] sm:$0xff] %v2398
        %2463 = vst [vmem:[%s326 + $0x20] sm:$0xff] %v2399
        %2464 = vst [vmem:[%s326 + $0x28] sm:$0xff] %v2400
        %2465 = vst [vmem:[%s326 + $0x30] sm:$0xff] %v2401
        %2466 = vst [vmem:[%s326 + $0x38] sm:$0xff] %v2402
        %2467 = vst [vmem:[%s326 + $0x40] sm:$0xff] %v2403
        %2468 = vst [vmem:[%s326 + $0x48] sm:$0xff] %v2404
        %2469 = vst [vmem:[%s326 + $0x50] sm:$0xff] %v2405
        %2470 = vst [vmem:[%s326 + $0x58] sm:$0xff] %v2406
        %2471 = vst [vmem:[%s326 + $0x60] sm:$0xff] %v2407
        %2472 = vst [vmem:[%s326 + $0x68] sm:$0xff] %v2408
        %2473 = vst [vmem:[%s326 + $0x70] sm:$0xff] %v2409
        %2474 = vst [vmem:[%s326 + $0x78] sm:$0xff] %v2410
        %2475 = vst [vmem:[%s326 + $0x80] sm:$0xff] %v2411
        %2476 = vst [vmem:[%s326 + $0x88] sm:$0xff] %v2412
        %2477 = vst [vmem:[%s326 + $0x90] sm:$0xff] %v2413
        %2478 = vst [vmem:[%s326 + $0x98] sm:$0xff] %v2414
        %2479 = vst [vmem:[%s326 + $0xa0] sm:$0xff] %v2415
        %2480 = vst [vmem:[%s326 + $0xa8] sm:$0xff] %v2416
        %2481 = vst [vmem:[%s326 + $0xb0] sm:$0xff] %v2417
        %2482 = vst [vmem:[%s326 + $0xb8] sm:$0xff] %v2418
        %2483 = vst [vmem:[%s326 + $0xc0] sm:$0xff] %v2419
        %2484 = vst [vmem:[%s326 + $0xc8] sm:$0xff] %v2420
        %2485 = vst [vmem:[%s326 + $0xd0] sm:$0xff] %v2421
        %2486 = vst [vmem:[%s326 + $0xd8] sm:$0xff] %v2422
        %2487 = vst [vmem:[%s326 + $0xe0] sm:$0xff] %v2423
        %2488 = vst [vmem:[%s326 + $0xe8] sm:$0xff] %v2424
        %2489 = vst [vmem:[%s326 + $0xf0] sm:$0xff] %v2425
        %2490 = vst [vmem:[%s326 + $0xf8] sm:$0xff] %v2426
        %2491 = vst [vmem:[%s326 + $0x100] sm:$0xff] %v2427
        %2492 = vst [vmem:[%s326 + $0x108] sm:$0xff] %v2428
        %2493 = vst [vmem:[%s326 + $0x110] sm:$0xff] %v2429
        %2494 = vst [vmem:[%s326 + $0x118] sm:$0xff] %v2430
        %2495 = vst [vmem:[%s326 + $0x120] sm:$0xff] %v2431
        %2496 = vst [vmem:[%s326 + $0x128] sm:$0xff] %v2432
        %2497 = vst [vmem:[%s326 + $0x130] sm:$0xff] %v2433
        %2498 = vst [vmem:[%s326 + $0x138] sm:$0xff] %v2434
        %2499 = vst [vmem:[%s326 + $0x140] sm:$0xff] %v2435
        %2500 = vst [vmem:[%s326 + $0x148] sm:$0xff] %v2436
        %2501 = vst [vmem:[%s326 + $0x150] sm:$0xff] %v2437
        %2502 = vst [vmem:[%s326 + $0x158] sm:$0xff] %v2438
        %2503 = vst [vmem:[%s326 + $0x160] sm:$0xff] %v2439
        %2504 = vst [vmem:[%s326 + $0x168] sm:$0xff] %v2440
        %2505 = vst [vmem:[%s326 + $0x170] sm:$0xff] %v2441
        %2506 = vst [vmem:[%s326 + $0x178] sm:$0xff] %v2442
        %2507 = vst [vmem:[%s326 + $0x180] sm:$0xff] %v2443
        %2508 = vst [vmem:[%s326 + $0x188] sm:$0xff] %v2444
        %2509 = vst [vmem:[%s326 + $0x190] sm:$0xff] %v2445
        %2510 = vst [vmem:[%s326 + $0x198] sm:$0xff] %v2446
        %2511 = vst [vmem:[%s326 + $0x1a0] sm:$0xff] %v2447
        %2512 = vst [vmem:[%s326 + $0x1a8] sm:$0xff] %v2448
        %2513 = vst [vmem:[%s326 + $0x1b0] sm:$0xff] %v2449
        %2514 = vst [vmem:[%s326 + $0x1b8] sm:$0xff] %v2450
        %2515 = vst [vmem:[%s326 + $0x1c0] sm:$0xff] %v2451
        %2516 = vst [vmem:[%s326 + $0x1c8] sm:$0xff] %v2452
        %2517 = vst [vmem:[%s326 + $0x1d0] sm:$0xff] %v2453
        %2518 = vst [vmem:[%s326 + $0x1d8] sm:$0xff] %v2454
        %2519 = vst [vmem:[%s326 + $0x1e0] sm:$0xff] %v2455
        %2520 = vst [vmem:[%s326 + $0x1e8] sm:$0xff] %v2456
        %2521 = vst [vmem:[%s326 + $0x1f0] sm:$0xff] %v2457
        %2522 = vst [vmem:[%s326 + $0x1f8] sm:$0xff] %v2458
        %s2523 = sand.u32 %s185, 1
        %s2524 = scalar_lea.sflag [#allocation4], %s2523
        %s2525 = sand.u32 %s185, 1
        %s2526 = smul.addr %s2525, 512
        %s2527 = scalar_lea.vmem [#allocation8], %s2526
        // Predicated region
        $region61: #{tpu_custom_call.1} parent=47 // pred_check
          %p2528 = pneg %p195
        $region62: #{tpu_custom_call.1} parent=47 // pred_check_branch
          %2530 = sbr.rel (%p2528) target = $region64
        $region63: #{tpu_custom_call.1} parent=47 // pred_region
          %s2531 = smul.u32 32, %s25
          %s2533 = ssub.s32 8192, 8192
          %2534 = vsyncadd %s2524, %s2533
          %s2535 = smul.addr %s2531, 2
          %s2536 = smul.addr %s2535, 128
          %s2537 = scalar_lea.hbm %s7, %s2536
          %s2538 = sshll.u32 %s2527, 4
          %s2539 = int_to_ptr.vmem [resolvable:$true] %s2538
          %2544 = dma.vmem_to_hbm [thread:$0]  %s2539, 8192, %s2537, %s2524, 256, 256, 16
        $region64: #{tpu_custom_call.1} parent=47 // pred_fallthru
          _
      $region48: #{tpu_custom_call.1} parent=5 // pred_fallthru
        _
      %p2545 = scmp.le.s32.totalorder 2, %s20
      // Predicated region
      $region65: #{tpu_custom_call.1} parent=5 // pred_check
        %p2546 = pneg %p2545
      $region66: #{tpu_custom_call.1} parent=5 // pred_check_branch
        %2548 = sbr.rel (%p2546) target = $region68
      $region67: #{tpu_custom_call.1} parent=5 // pred_region
        %s2549 = ssub.s32 %s20, 2
        // Predicated region
        $region69: #{tpu_custom_call.1} parent=67 // pred_check
          %p2550 = pneg %p201
        $region70: #{tpu_custom_call.1} parent=67 // pred_check_branch
          %2552 = sbr.rel (%p2550) target = $region72
        $region71: #{tpu_custom_call.1} parent=67 // pred_region
          %s2553 = sand.u32 %s186, 1
          %s2554 = scalar_lea.sflag [#allocation4], %s2553
          %s2555 = sand.u32 %s186, 1
          %s2556 = smul.addr %s2555, 512
          %s2557 = scalar_lea.vmem [#allocation8], %s2556
          %2558 = dma.done %s2554, 8192
        $region72: #{tpu_custom_call.1} parent=67 // pred_fallthru
          _
      $region68: #{tpu_custom_call.1} parent=5 // pred_fallthru
        _
    $region6: #{tpu_custom_call.1} parent=1 // loop_footer
      %s24 = sadd.s32 1, %s20
    $region7: #{tpu_custom_call.1} parent=1 // loop_footer_branch
      %19 = sbr.rel target = $region3
    $region8: #{tpu_custom_call.1} parent=1 // loop_exit
      _
    %2559 = vsyncpa [#allocation3], 1
    %s2560 = scalar_lea.sflag [#allocation3], 1
    %2561 = vsyncpa %s2560, 1
    %2562 = vsyncpa [#allocation6], 1
    %2563 = vsyncpa [#allocation4], 1
    %s2564 = scalar_lea.sflag [#allocation4], 1
    %2565 = vsyncpa %s2564, 1

</llo_original>
